<compile_context>
chip_gen: v5e
topology: v5e:2x2
jax: 0.10.0
libtpu: 0.0.40
codegen_flags: <defaults>
</compile_context>

<pallas_src>
import functools

import jax
import jax.numpy as jnp
from jax.experimental import pallas as pl
from jax.experimental.pallas import tpu as pltpu


def _layernorm(h, w, b, eps=1e-5):
    mu = jnp.mean(h, axis=-1, keepdims=True)
    var = jnp.mean((h - mu) ** 2, axis=-1, keepdims=True)
    return (h - mu) * jax.lax.rsqrt(var + eps) * w + b


def transformer_block_kernel(
    x_ref,                    # (Bt, N, D)
    ln1w_ref, ln1b_ref,       # (1, D) f32
    wqkv_ref,                 # (D, 3*inner) bf16, Wq pre-scaled by dim_head**-0.5
    wo_ref, bo_ref,           # (inner, D) bf16, (1, D) f32
    ln3w_ref, ln3b_ref,       # (1, D) f32
    w1_ref, b1_ref,           # (D, 4D) bf16, (1, 4D) f32
    w2_ref, b2_ref,           # (4D, D) bf16, (1, D) f32
    o_ref,                    # (Bt, N, D)
    *, heads, dim_head,
):
    Bt, N, D = x_ref.shape
    H, dh = heads, dim_head
    inner = H * dh

    # Flatten the whole batch tile: every row-wise op (LayerNorm, QKV, Wo, FFN)
    # feeds Bt*N rows to the MXU per pass instead of N (review: row batching /
    # per-step overhead elimination).
    x = x_ref[...].astype(jnp.float32).reshape(Bt * N, D)

    # ---- x = attn1(norm1(x)) + x -------------------------------------------
    h = _layernorm(x, ln1w_ref[...], ln1b_ref[...])

    # Fused QKV projection: one MXU pass, bf16 operands, f32 accumulation.
    qkv = jnp.dot(h.astype(jnp.bfloat16), wqkv_ref[...],
                  preferred_element_type=jnp.float32)            # (Bt*N, 3*inner)

    # Heads move from matmul columns to a single einsum batch axis (Bt*H).
    # The (n <-> h) swap below is the one unavoidable relayout in the block; it
    # is done once on a tiny (Bt, 3H, N, dh) tensor and keeps dh on the lane
    # axis.  (A 4-D multi-batch-dim einsum would avoid it syntactically but
    # risks unsupported dot_general forms in the Mosaic lowering.)
    qkvh = qkv.reshape(Bt, N, 3 * H, dh).transpose(0, 2, 1, 3)   # (Bt, 3H, N, dh)
    qh = qkvh[:, :H].reshape(Bt * H, N, dh)                      # pre-scaled
    kh = qkvh[:, H:2 * H].reshape(Bt * H, N, dh)
    vh = qkvh[:, 2 * H:].reshape(Bt * H, N, dh)

    # Attention batched over all (batch, head) pairs at once.
    # TODO(synk): at realistic N, switch to a flash-style KV-block loop with an
    # online-softmax accumulator so only (Z, tq, tk) of sim/p is ever live.
    sim = jnp.einsum("znd,zmd->znm",
                     qh.astype(jnp.bfloat16), kh.astype(jnp.bfloat16),
                     preferred_element_type=jnp.float32)         # (Bt*H, N, N)
    sim = sim - jnp.max(sim, axis=-1, keepdims=True)
    p = jnp.exp(sim)                                             # unnormalized
    l = jnp.sum(p, axis=-1, keepdims=True)                       # (Bt*H, N, 1)
    # NOTE: p -> bf16 for the MXU is the dominant error term; well inside the
    # 2e-2 tolerance (keep f32 here if tolerances tighten).
    oh = jnp.einsum("znm,zmd->znd",
                    p.astype(jnp.bfloat16), vh.astype(jnp.bfloat16),
                    preferred_element_type=jnp.float32)          # (Bt*H, N, dh)
    # Deferred softmax normalization on the small (.., dh) tensor; the approx
    # reciprocal runs in the otherwise-idle EUP slot.
    oh = oh * pl.reciprocal(l, approx=True)

    # Back to channel-concat layout (b, n, h*dh) for the output projection.
    attn = oh.reshape(Bt, H, N, dh).transpose(0, 2, 1, 3).reshape(Bt * N, inner)
    attn = jnp.dot(attn.astype(jnp.bfloat16), wo_ref[...],
                   preferred_element_type=jnp.float32) + bo_ref[...]
    x = attn + x                                                 # residual 1

    # ---- x = ff(norm3(x)) + x ------------------------------------------------
    # TODO(synk): at realistic D, K-tile W1/W2 (stream 128-wide blocks with an
    # f32 accumulator) instead of whole-array residency; the GELU/bias math on
    # the hidden tensor could be bf16 on v6e/v7x (kept f32 here: v5e has no
    # bf16 VPU path and shapes are tiny).
    h = _layernorm(x, ln3w_ref[...], ln3b_ref[...])
    h = jnp.dot(h.astype(jnp.bfloat16), w1_ref[...],
                preferred_element_type=jnp.float32) + b1_ref[...]
    # exact GELU (PyTorch nn.GELU default): 0.5*x*(1+erf(x/sqrt(2)))
    h = 0.5 * h * (1.0 + jax.lax.erf(h * 0.7071067811865476))
    h = jnp.dot(h.astype(jnp.bfloat16), w2_ref[...],
                preferred_element_type=jnp.float32) + b2_ref[...]
    o_ref[...] = (h + x).reshape(Bt, N, D).astype(o_ref.dtype)   # residual 2


def prepare_params(params, *, heads, dim_head):
    """One-time weight prep (hoisted out of the per-call path): fold the
    attention scale into Wq, fuse Wq/Wk/Wv into one (D, 3*inner) matrix, store
    matmul weights in bf16 (MXU-native, halves weight DMA/VMEM).  LayerNorm
    params and biases stay f32."""
    (ln1w, ln1b, wq, wk, wv, wo, bo, ln3w, ln3b, w1, b1, w2, b2) = params
    scale = dim_head ** (-0.5)
    wqkv = jnp.concatenate([wq * scale, wk, wv], axis=1).astype(jnp.bfloat16)
    return (ln1w, ln1b, wqkv, wo.astype(jnp.bfloat16), bo,
            ln3w, ln3b, w1.astype(jnp.bfloat16), b1,
            w2.astype(jnp.bfloat16), b2)


def transformer_block(x, prepped, *, heads, dim_head, block_b=None):
    B, N, D = x.shape
    inner = heads * dim_head
    hidden = 4 * D
    (ln1w, ln1b, wqkv, wo, bo, ln3w, ln3b, w1, b1, w2, b2) = prepped

    if block_b is None:
        # Batch as many rows per grid step as possible (MXU occupancy, ~0.35us
        # per-step overhead); keep 2 "parallel" grid steps when B allows it so
        # both v7x TensorCores get work.  For tiny B the whole batch goes in
        # one step (single-TC chips gain nothing from extra steps).
        block_b = B // 2 if (B >= 4 and B % 2 == 0) else B
    assert B % block_b == 0, "batch must divide evenly into batch tiles"
    grid = (B // block_b,)

    kernel = functools.partial(transformer_block_kernel,
                               heads=heads, dim_head=dim_head)

    # Generation-aware scoped-VMEM limit: ~3/4 of physical per-core VMEM,
    # capped at 100 MiB (v5e/v6e: 128 MiB physical; v7x: only 64 MiB).
    try:
        cap = pltpu.get_tpu_info().vmem_capacity_bytes
        vmem_limit = int(min(100 << 20, (cap * 3) // 4))
    except Exception:
        vmem_limit = 48 << 20          # safe on every generation

    args = (x, ln1w, ln1b, wqkv, wo, bo, ln3w, ln3b, w1, b1, w2, b2)

    def build(single_buffer_weights):
        w_kwargs = (dict(pipeline_mode=pl.Buffered(1))
                    if single_buffer_weights else {})

        def weight_spec(shape):
            # Grid-invariant weights/biases: same block every step; single-
            # buffer them (double-buffering constants only wastes VMEM).
            return pl.BlockSpec(shape, lambda b: (0,) * len(shape), **w_kwargs)

        in_specs = [
            pl.BlockSpec((block_b, N, D), lambda b: (b, 0, 0)),  # x: batch tile
            weight_spec((1, D)), weight_spec((1, D)),            # ln1 w / b
            weight_spec((D, 3 * inner)),                         # fused Wqkv
            weight_spec((inner, D)), weight_spec((1, D)),        # Wo, bo
            weight_spec((1, D)), weight_spec((1, D)),            # ln3 w / b
            weight_spec((D, hidden)), weight_spec((1, hidden)),  # W1, b1
            weight_spec((hidden, D)), weight_spec((1, D)),       # W2, b2
        ]
        # TODO(synk): if query_dim stays this small (32) in production, pad the
        # channel dim to 128 in the wrapper so activation vregs / output stores
        # are lane-dense (biggest remaining lever at D=32).
        return pl.pallas_call(
            kernel,
            out_shape=jax.ShapeDtypeStruct((B, N, D), x.dtype),
            grid=grid,
            in_specs=in_specs,
            out_specs=pl.BlockSpec((block_b, N, D), lambda b: (b, 0, 0)),
            compiler_params=pltpu.CompilerParams(
                dimension_semantics=("parallel",),
                vmem_limit_bytes=vmem_limit),
        )

    try:
        return build(True)(*args)
    except Exception:
        # pipeline_mode=pl.Buffered(1) not supported by this jax/Mosaic build;
        # fall back to default double-buffering (costs VMEM only, not speed).
        return build(False)(*args)


def reference(x, params, *, heads, dim_head):
    """Pure-JAX f32 reference mirroring the PyTorch forward, for verification."""
    (ln1w, ln1b, wq, wk, wv, wo, bo, ln3w, ln3b, w1, b1, w2, b2) = params

    def ln(h, w, b):
        mu = h.mean(-1, keepdims=True)
        var = ((h - mu) ** 2).mean(-1, keepdims=True)
        return (h - mu) / jnp.sqrt(var + 1e-5) * w + b

    B, N, D = x.shape
    h = ln(x, ln1w[0], ln1b[0])
    q, k, v = h @ wq, h @ wk, h @ wv
    qh = q.reshape(B, N, heads, dim_head).transpose(0, 2, 1, 3)
    kh = k.reshape(B, N, heads, dim_head).transpose(0, 2, 1, 3)
    vh = v.reshape(B, N, heads, dim_head).transpose(0, 2, 1, 3)
    sim = jnp.einsum("bhid,bhjd->bhij", qh, kh) * dim_head ** (-0.5)
    p = jax.nn.softmax(sim, axis=-1)
    o = jnp.einsum("bhij,bhjd->bhid", p, vh).transpose(0, 2, 1, 3).reshape(
        B, N, heads * dim_head)
    o = o @ wo + bo[0]
    x = o + x
    h = ln(x, ln3w[0], ln3b[0])
    h = h @ w1 + b1[0]
    h = 0.5 * h * (1.0 + jax.lax.erf(h / jnp.sqrt(2.0)))
    h = h @ w2 + b2[0]
    return h + x


if __name__ == "__main__":
    # Small shapes consistent with the module: query_dim=32, n_heads=2, d_head=16.
    B, N, D = 2, 8, 32
    HEADS, DIM_HEAD = 2, 16
    INNER = HEADS * DIM_HEAD
    HIDDEN = 4 * D

    key = jax.random.PRNGKey(0)
    ks = jax.random.split(key, 16)

    def w(k, shape, scale=0.05):
        return (scale * jax.random.normal(k, shape)).astype(jnp.float32)

    x = jax.random.normal(ks[0], (B, N, D), dtype=jnp.float32)

    params = (
        w(ks[1], (1, D)) + 1.0,       # ln1 weight (around 1)
        w(ks[2], (1, D)),             # ln1 bias
        w(ks[3], (D, INNER)),         # Wq
        w(ks[4], (D, INNER)),         # Wk
        w(ks[5], (D, INNER)),         # Wv
        w(ks[6], (INNER, D)),         # Wo
        w(ks[7], (1, D)),             # bo
        w(ks[8], (1, D)) + 1.0,       # ln3 weight
        w(ks[9], (1, D)),             # ln3 bias
        w(ks[10], (D, HIDDEN)),       # W1
        w(ks[11], (1, HIDDEN)),       # b1
        w(ks[12], (HIDDEN, D)),       # W2
        w(ks[13], (1, D)),            # b2
    )

    # One-time weight prep (scale folding, QKV fusion, bf16 casts).
    prepped = prepare_params(params, heads=HEADS, dim_head=DIM_HEAD)

    out = transformer_block(x, prepped, heads=HEADS, dim_head=DIM_HEAD)
    out = jax.block_until_ready(out)

    ref = reference(x, params, heads=HEADS, dim_head=DIM_HEAD)
    assert out.shape == (B, N, D)
    # Tolerance reflects bf16 MXU operands (f32 accumulation, f32 elementwise path).
    err = float(jnp.max(jnp.abs(out - ref)))
    assert jnp.allclose(out, ref, atol=2e-2, rtol=2e-2), err

    print("KERNEL_OK")
</pallas_src>

<mosaic_0001>
module attributes {stable_mosaic.version = 11 : i64} {
  func.func @transformer_block_kernel(%arg0: i32, %arg1: memref<2x8x32xf32, #tpu.memory_space<vmem>>, %arg2: memref<1x32xf32, #tpu.memory_space<vmem>>, %arg3: memref<1x32xf32, #tpu.memory_space<vmem>>, %arg4: memref<32x96xbf16, #tpu.memory_space<vmem>>, %arg5: memref<32x32xbf16, #tpu.memory_space<vmem>>, %arg6: memref<1x32xf32, #tpu.memory_space<vmem>>, %arg7: memref<1x32xf32, #tpu.memory_space<vmem>>, %arg8: memref<1x32xf32, #tpu.memory_space<vmem>>, %arg9: memref<32x128xbf16, #tpu.memory_space<vmem>>, %arg10: memref<1x128xf32, #tpu.memory_space<vmem>>, %arg11: memref<128x32xbf16, #tpu.memory_space<vmem>>, %arg12: memref<1x32xf32, #tpu.memory_space<vmem>>, %arg13: memref<2x8x32xf32, #tpu.memory_space<vmem>>) attributes {dimension_semantics = [#tpu.dimension_semantics<parallel>], iteration_bounds = array<i64: 1>, scalar_prefetch = 0 : i64, scratch_operands = 0 : i64, tpu.core_type = #tpu.core_type<tc>, window_params = [{transform_indices = @transform_0, window_bounds = array<i64: 2, 8, 32>}, {pipeline_mode = #tpu.pipeline_mode<synchronous>, transform_indices = @transform_1, window_bounds = array<i64: 1, 32>}, {pipeline_mode = #tpu.pipeline_mode<synchronous>, transform_indices = @transform_2, window_bounds = array<i64: 1, 32>}, {pipeline_mode = #tpu.pipeline_mode<synchronous>, transform_indices = @transform_3, window_bounds = array<i64: 32, 96>}, {pipeline_mode = #tpu.pipeline_mode<synchronous>, transform_indices = @transform_4, window_bounds = array<i64: 32, 32>}, {pipeline_mode = #tpu.pipeline_mode<synchronous>, transform_indices = @transform_5, window_bounds = array<i64: 1, 32>}, {pipeline_mode = #tpu.pipeline_mode<synchronous>, transform_indices = @transform_6, window_bounds = array<i64: 1, 32>}, {pipeline_mode = #tpu.pipeline_mode<synchronous>, transform_indices = @transform_7, window_bounds = array<i64: 1, 32>}, {pipeline_mode = #tpu.pipeline_mode<synchronous>, transform_indices = @transform_8, window_bounds = array<i64: 32, 128>}, {pipeline_mode = #tpu.pipeline_mode<synchronous>, transform_indices = @transform_9, window_bounds = array<i64: 1, 128>}, {pipeline_mode = #tpu.pipeline_mode<synchronous>, transform_indices = @transform_10, window_bounds = array<i64: 128, 32>}, {pipeline_mode = #tpu.pipeline_mode<synchronous>, transform_indices = @transform_11, window_bounds = array<i64: 1, 32>}, {transform_indices = @transform_12, window_bounds = array<i64: 2, 8, 32>}]} {
    %c0 = arith.constant 0 : index
    %c0_0 = arith.constant 0 : index
    %c0_1 = arith.constant 0 : index
    %0 = vector.load %arg1[%c0, %c0_0, %c0_1] : memref<2x8x32xf32, #tpu.memory_space<vmem>>, vector<2x8x32xf32>
    %1 = vector.shape_cast %0 : vector<2x8x32xf32> to vector<16x32xf32>
    %c0_2 = arith.constant 0 : index
    %c0_3 = arith.constant 0 : index
    %2 = vector.load %arg2[%c0_2, %c0_3] : memref<1x32xf32, #tpu.memory_space<vmem>>, vector<1x32xf32>
    %c0_4 = arith.constant 0 : index
    %c0_5 = arith.constant 0 : index
    %3 = vector.load %arg3[%c0_4, %c0_5] : memref<1x32xf32, #tpu.memory_space<vmem>>, vector<1x32xf32>
    %cst = arith.constant dense<0.000000e+00> : vector<16xf32>
    %4 = vector.multi_reduction <add>, %1, %cst [1] : vector<16x32xf32> to vector<16xf32>
    %5 = vector.shape_cast %4 : vector<16xf32> to vector<16x1xf32>
    %cst_6 = arith.constant 3.200000e+01 : f32
    %6 = vector.broadcast %cst_6 : f32 to vector<16x1xf32>
    %7 = arith.divf %5, %6 : vector<16x1xf32>
    %8 = vector.broadcast %7 : vector<16x1xf32> to vector<16x32xf32>
    %9 = arith.subf %1, %8 : vector<16x32xf32>
    %10 = arith.mulf %9, %9 : vector<16x32xf32>
    %cst_7 = arith.constant dense<0.000000e+00> : vector<16xf32>
    %11 = vector.multi_reduction <add>, %10, %cst_7 [1] : vector<16x32xf32> to vector<16xf32>
    %12 = vector.shape_cast %11 : vector<16xf32> to vector<16x1xf32>
    %cst_8 = arith.constant 3.200000e+01 : f32
    %13 = vector.broadcast %cst_8 : f32 to vector<16x1xf32>
    %14 = arith.divf %12, %13 : vector<16x1xf32>
    %15 = vector.broadcast %7 : vector<16x1xf32> to vector<16x32xf32>
    %16 = arith.subf %1, %15 : vector<16x32xf32>
    %cst_9 = arith.constant 9.99999974E-6 : f32
    %17 = vector.broadcast %cst_9 : f32 to vector<16x1xf32>
    %18 = arith.addf %14, %17 : vector<16x1xf32>
    %19 = math.rsqrt %18 : vector<16x1xf32>
    %20 = vector.broadcast %19 : vector<16x1xf32> to vector<16x32xf32>
    %21 = arith.mulf %16, %20 : vector<16x32xf32>
    %22 = vector.broadcast %2 : vector<1x32xf32> to vector<16x32xf32>
    %23 = arith.mulf %21, %22 : vector<16x32xf32>
    %24 = vector.broadcast %3 : vector<1x32xf32> to vector<16x32xf32>
    %25 = arith.addf %23, %24 : vector<16x32xf32>
    %26 = arith.truncf %25 : vector<16x32xf32> to vector<16x32xbf16>
    %c0_10 = arith.constant 0 : index
    %c0_11 = arith.constant 0 : index
    %27 = vector.load %arg4[%c0_10, %c0_11] : memref<32x96xbf16, #tpu.memory_space<vmem>>, vector<32x96xbf16>
    %cst_12 = arith.constant dense<0.000000e+00> : vector<16x96xf32>
    %28 = tpu.matmul %26, %27, %cst_12 {dimension_numbers = #tpu.dot_dimension_numbers<[1], [0], [0], [1], [0, 0, 1, 1], [], []>} : vector<16x32xbf16>, vector<32x96xbf16>, vector<16x96xf32> -> vector<16x96xf32>
    %29 = vector.shape_cast %28 : vector<16x96xf32> to vector<2x8x6x16xf32>
    %30 = tpu.transpose %29, [0, 2, 1, 3] : vector<2x8x6x16xf32> -> vector<2x6x8x16xf32>
    %31 = vector.extract_strided_slice %30 {offsets = [0, 0, 0, 0], sizes = [2, 2, 8, 16], strides = [1, 1, 1, 1]} : vector<2x6x8x16xf32> to vector<2x2x8x16xf32>
    %32 = vector.shape_cast %31 : vector<2x2x8x16xf32> to vector<4x8x16xf32>
    %33 = vector.extract_strided_slice %30 {offsets = [0, 2, 0, 0], sizes = [2, 2, 8, 16], strides = [1, 1, 1, 1]} : vector<2x6x8x16xf32> to vector<2x2x8x16xf32>
    %34 = vector.shape_cast %33 : vector<2x2x8x16xf32> to vector<4x8x16xf32>
    %35 = vector.extract_strided_slice %30 {offsets = [0, 4, 0, 0], sizes = [2, 2, 8, 16], strides = [1, 1, 1, 1]} : vector<2x6x8x16xf32> to vector<2x2x8x16xf32>
    %36 = vector.shape_cast %35 : vector<2x2x8x16xf32> to vector<4x8x16xf32>
    %37 = arith.truncf %32 : vector<4x8x16xf32> to vector<4x8x16xbf16>
    %38 = arith.truncf %34 : vector<4x8x16xf32> to vector<4x8x16xbf16>
    "tpu.trace_start"() <{level = 10 : i32, message = "znd,zmd->znm"}> : () -> ()
    %cst_13 = arith.constant dense<0.000000e+00> : vector<4x8x8xf32>
    %39 = tpu.matmul %37, %38, %cst_13 {dimension_numbers = #tpu.dot_dimension_numbers<[2], [2], [1], [1], [0, 0, 0, 1, 1, 1], [0], [0]>} : vector<4x8x16xbf16>, vector<4x8x16xbf16>, vector<4x8x8xf32> -> vector<4x8x8xf32>
    "tpu.trace_stop"() : () -> ()
    %cst_14 = arith.constant dense<0xFF800000> : vector<4x8xf32>
    %40 = vector.multi_reduction <maximumf>, %39, %cst_14 [2] : vector<4x8x8xf32> to vector<4x8xf32>
    %41 = vector.shape_cast %40 : vector<4x8xf32> to vector<4x8x1xf32>
    %42 = vector.broadcast %41 : vector<4x8x1xf32> to vector<4x8x8xf32>
    %43 = arith.subf %39, %42 : vector<4x8x8xf32>
    %44 = math.exp %43 : vector<4x8x8xf32>
    %cst_15 = arith.constant dense<0.000000e+00> : vector<4x8xf32>
    %45 = vector.multi_reduction <add>, %44, %cst_15 [2] : vector<4x8x8xf32> to vector<4x8xf32>
    %46 = vector.shape_cast %45 : vector<4x8xf32> to vector<4x8x1xf32>
    %47 = arith.truncf %44 : vector<4x8x8xf32> to vector<4x8x8xbf16>
    %48 = arith.truncf %36 : vector<4x8x16xf32> to vector<4x8x16xbf16>
    "tpu.trace_start"() <{level = 10 : i32, message = "znm,zmd->znd"}> : () -> ()
    %cst_16 = arith.constant dense<0.000000e+00> : vector<4x8x16xf32>
    %49 = tpu.matmul %47, %48, %cst_16 {dimension_numbers = #tpu.dot_dimension_numbers<[2], [1], [1], [2], [0, 0, 0, 1, 1, 2], [0], [0]>} : vector<4x8x8xbf16>, vector<4x8x16xbf16>, vector<4x8x16xf32> -> vector<4x8x16xf32>
    "tpu.trace_stop"() : () -> ()
    %50 = tpu.reciprocal %46 {approx = true} : vector<4x8x1xf32> -> vector<4x8x1xf32>
    %51 = vector.broadcast %50 : vector<4x8x1xf32> to vector<4x8x16xf32>
    %52 = arith.mulf %49, %51 : vector<4x8x16xf32>
    %53 = vector.shape_cast %52 : vector<4x8x16xf32> to vector<2x2x8x16xf32>
    %54 = tpu.transpose %53, [0, 2, 1, 3] : vector<2x2x8x16xf32> -> vector<2x8x2x16xf32>
    %55 = vector.shape_cast %54 : vector<2x8x2x16xf32> to vector<16x32xf32>
    %56 = arith.truncf %55 : vector<16x32xf32> to vector<16x32xbf16>
    %c0_17 = arith.constant 0 : index
    %c0_18 = arith.constant 0 : index
    %57 = vector.load %arg5[%c0_17, %c0_18] : memref<32x32xbf16, #tpu.memory_space<vmem>>, vector<32x32xbf16>
    %cst_19 = arith.constant dense<0.000000e+00> : vector<16x32xf32>
    %58 = tpu.matmul %56, %57, %cst_19 {dimension_numbers = #tpu.dot_dimension_numbers<[1], [0], [0], [1], [0, 0, 1, 1], [], []>} : vector<16x32xbf16>, vector<32x32xbf16>, vector<16x32xf32> -> vector<16x32xf32>
    %c0_20 = arith.constant 0 : index
    %c0_21 = arith.constant 0 : index
    %59 = vector.load %arg6[%c0_20, %c0_21] : memref<1x32xf32, #tpu.memory_space<vmem>>, vector<1x32xf32>
    %60 = vector.broadcast %59 : vector<1x32xf32> to vector<16x32xf32>
    %61 = arith.addf %58, %60 : vector<16x32xf32>
    %62 = arith.addf %61, %1 : vector<16x32xf32>
    %c0_22 = arith.constant 0 : index
    %c0_23 = arith.constant 0 : index
    %63 = vector.load %arg7[%c0_22, %c0_23] : memref<1x32xf32, #tpu.memory_space<vmem>>, vector<1x32xf32>
    %c0_24 = arith.constant 0 : index
    %c0_25 = arith.constant 0 : index
    %64 = vector.load %arg8[%c0_24, %c0_25] : memref<1x32xf32, #tpu.memory_space<vmem>>, vector<1x32xf32>
    %cst_26 = arith.constant dense<0.000000e+00> : vector<16xf32>
    %65 = vector.multi_reduction <add>, %62, %cst_26 [1] : vector<16x32xf32> to vector<16xf32>
    %66 = vector.shape_cast %65 : vector<16xf32> to vector<16x1xf32>
    %cst_27 = arith.constant 3.200000e+01 : f32
    %67 = vector.broadcast %cst_27 : f32 to vector<16x1xf32>
    %68 = arith.divf %66, %67 : vector<16x1xf32>
    %69 = vector.broadcast %68 : vector<16x1xf32> to vector<16x32xf32>
    %70 = arith.subf %62, %69 : vector<16x32xf32>
    %71 = arith.mulf %70, %70 : vector<16x32xf32>
    %cst_28 = arith.constant dense<0.000000e+00> : vector<16xf32>
    %72 = vector.multi_reduction <add>, %71, %cst_28 [1] : vector<16x32xf32> to vector<16xf32>
    %73 = vector.shape_cast %72 : vector<16xf32> to vector<16x1xf32>
    %cst_29 = arith.constant 3.200000e+01 : f32
    %74 = vector.broadcast %cst_29 : f32 to vector<16x1xf32>
    %75 = arith.divf %73, %74 : vector<16x1xf32>
    %76 = vector.broadcast %68 : vector<16x1xf32> to vector<16x32xf32>
    %77 = arith.subf %62, %76 : vector<16x32xf32>
    %cst_30 = arith.constant 9.99999974E-6 : f32
    %78 = vector.broadcast %cst_30 : f32 to vector<16x1xf32>
    %79 = arith.addf %75, %78 : vector<16x1xf32>
    %80 = math.rsqrt %79 : vector<16x1xf32>
    %81 = vector.broadcast %80 : vector<16x1xf32> to vector<16x32xf32>
    %82 = arith.mulf %77, %81 : vector<16x32xf32>
    %83 = vector.broadcast %63 : vector<1x32xf32> to vector<16x32xf32>
    %84 = arith.mulf %82, %83 : vector<16x32xf32>
    %85 = vector.broadcast %64 : vector<1x32xf32> to vector<16x32xf32>
    %86 = arith.addf %84, %85 : vector<16x32xf32>
    %87 = arith.truncf %86 : vector<16x32xf32> to vector<16x32xbf16>
    %c0_31 = arith.constant 0 : index
    %c0_32 = arith.constant 0 : index
    %88 = vector.load %arg9[%c0_31, %c0_32] : memref<32x128xbf16, #tpu.memory_space<vmem>>, vector<32x128xbf16>
    %cst_33 = arith.constant dense<0.000000e+00> : vector<16x128xf32>
    %89 = tpu.matmul %87, %88, %cst_33 {dimension_numbers = #tpu.dot_dimension_numbers<[1], [0], [0], [1], [0, 0, 1, 1], [], []>} : vector<16x32xbf16>, vector<32x128xbf16>, vector<16x128xf32> -> vector<16x128xf32>
    %c0_34 = arith.constant 0 : index
    %c0_35 = arith.constant 0 : index
    %90 = vector.load %arg10[%c0_34, %c0_35] : memref<1x128xf32, #tpu.memory_space<vmem>>, vector<1x128xf32>
    %91 = vector.broadcast %90 : vector<1x128xf32> to vector<16x128xf32>
    %92 = arith.addf %89, %91 : vector<16x128xf32>
    %cst_36 = arith.constant 5.000000e-01 : f32
    %93 = vector.broadcast %cst_36 : f32 to vector<16x128xf32>
    %94 = arith.mulf %93, %92 : vector<16x128xf32>
    %cst_37 = arith.constant 0.707106769 : f32
    %95 = vector.broadcast %cst_37 : f32 to vector<16x128xf32>
    %96 = arith.mulf %92, %95 : vector<16x128xf32>
    %97 = math.erf %96 : vector<16x128xf32>
    %cst_38 = arith.constant 1.000000e+00 : f32
    %98 = vector.broadcast %cst_38 : f32 to vector<16x128xf32>
    %99 = arith.addf %98, %97 : vector<16x128xf32>
    %100 = arith.mulf %94, %99 : vector<16x128xf32>
    %101 = arith.truncf %100 : vector<16x128xf32> to vector<16x128xbf16>
    %c0_39 = arith.constant 0 : index
    %c0_40 = arith.constant 0 : index
    %102 = vector.load %arg11[%c0_39, %c0_40] : memref<128x32xbf16, #tpu.memory_space<vmem>>, vector<128x32xbf16>
    %cst_41 = arith.constant dense<0.000000e+00> : vector<16x32xf32>
    %103 = tpu.matmul %101, %102, %cst_41 {dimension_numbers = #tpu.dot_dimension_numbers<[1], [0], [0], [1], [0, 0, 1, 1], [], []>} : vector<16x128xbf16>, vector<128x32xbf16>, vector<16x32xf32> -> vector<16x32xf32>
    %c0_42 = arith.constant 0 : index
    %c0_43 = arith.constant 0 : index
    %104 = vector.load %arg12[%c0_42, %c0_43] : memref<1x32xf32, #tpu.memory_space<vmem>>, vector<1x32xf32>
    %105 = vector.broadcast %104 : vector<1x32xf32> to vector<16x32xf32>
    %106 = arith.addf %103, %105 : vector<16x32xf32>
    %107 = arith.addf %106, %62 : vector<16x32xf32>
    %108 = vector.shape_cast %107 : vector<16x32xf32> to vector<2x8x32xf32>
    %c0_44 = arith.constant 0 : index
    %c0_45 = arith.constant 0 : index
    %c0_46 = arith.constant 0 : index
    %109 = vector.load %arg13[%c0_44, %c0_45, %c0_46] : memref<2x8x32xf32, #tpu.memory_space<vmem>>, vector<2x8x32xf32>
    tpu.vector_store %arg13[%c0_44, %c0_45, %c0_46], %108 {strides = array<i32>} : memref<2x8x32xf32, #tpu.memory_space<vmem>>, vector<2x8x32xf32>,
    return
  }
  func.func @transform_0(%arg0: i32) -> (i32, i32, i32) {
    %c0_i32 = arith.constant 0 : i32
    %c0_i32_0 = arith.constant 0 : i32
    %c0_i32_1 = arith.constant 0 : i32
    return %arg0, %c0_i32, %c0_i32_0 : i32, i32, i32
  }
  func.func @transform_1(%arg0: i32) -> (i32, i32) {
    %c0_i32 = arith.constant 0 : i32
    %c0_i32_0 = arith.constant 0 : i32
    %c0_i32_1 = arith.constant 0 : i32
    return %c0_i32, %c0_i32_0 : i32, i32
  }
  func.func @transform_2(%arg0: i32) -> (i32, i32) {
    %c0_i32 = arith.constant 0 : i32
    %c0_i32_0 = arith.constant 0 : i32
    %c0_i32_1 = arith.constant 0 : i32
    return %c0_i32, %c0_i32_0 : i32, i32
  }
  func.func @transform_3(%arg0: i32) -> (i32, i32) {
    %c0_i32 = arith.constant 0 : i32
    %c0_i32_0 = arith.constant 0 : i32
    %c0_i32_1 = arith.constant 0 : i32
    return %c0_i32, %c0_i32_0 : i32, i32
  }
  func.func @transform_4(%arg0: i32) -> (i32, i32) {
    %c0_i32 = arith.constant 0 : i32
    %c0_i32_0 = arith.constant 0 : i32
    %c0_i32_1 = arith.constant 0 : i32
    return %c0_i32, %c0_i32_0 : i32, i32
  }
  func.func @transform_5(%arg0: i32) -> (i32, i32) {
    %c0_i32 = arith.constant 0 : i32
    %c0_i32_0 = arith.constant 0 : i32
    %c0_i32_1 = arith.constant 0 : i32
    return %c0_i32, %c0_i32_0 : i32, i32
  }
  func.func @transform_6(%arg0: i32) -> (i32, i32) {
    %c0_i32 = arith.constant 0 : i32
    %c0_i32_0 = arith.constant 0 : i32
    %c0_i32_1 = arith.constant 0 : i32
    return %c0_i32, %c0_i32_0 : i32, i32
  }
  func.func @transform_7(%arg0: i32) -> (i32, i32) {
    %c0_i32 = arith.constant 0 : i32
    %c0_i32_0 = arith.constant 0 : i32
    %c0_i32_1 = arith.constant 0 : i32
    return %c0_i32, %c0_i32_0 : i32, i32
  }
  func.func @transform_8(%arg0: i32) -> (i32, i32) {
    %c0_i32 = arith.constant 0 : i32
    %c0_i32_0 = arith.constant 0 : i32
    %c0_i32_1 = arith.constant 0 : i32
    return %c0_i32, %c0_i32_0 : i32, i32
  }
  func.func @transform_9(%arg0: i32) -> (i32, i32) {
    %c0_i32 = arith.constant 0 : i32
    %c0_i32_0 = arith.constant 0 : i32
    %c0_i32_1 = arith.constant 0 : i32
    return %c0_i32, %c0_i32_0 : i32, i32
  }
  func.func @transform_10(%arg0: i32) -> (i32, i32) {
    %c0_i32 = arith.constant 0 : i32
    %c0_i32_0 = arith.constant 0 : i32
    %c0_i32_1 = arith.constant 0 : i32
    return %c0_i32, %c0_i32_0 : i32, i32
  }
  func.func @transform_11(%arg0: i32) -> (i32, i32) {
    %c0_i32 = arith.constant 0 : i32
    %c0_i32_0 = arith.constant 0 : i32
    %c0_i32_1 = arith.constant 0 : i32
    return %c0_i32, %c0_i32_0 : i32, i32
  }
  func.func @transform_12(%arg0: i32) -> (i32, i32, i32) {
    %c0_i32 = arith.constant 0 : i32
    %c0_i32_0 = arith.constant 0 : i32
    %c0_i32_1 = arith.constant 0 : i32
    return %arg0, %c0_i32, %c0_i32_0 : i32, i32, i32
  }
}

module attributes {stable_mosaic.version = 11 : i64} {
  func.func @transformer_block_kernel(%arg0: i32, %arg1: memref<2x8x32xf32, #tpu.memory_space<vmem>>, %arg2: memref<1x32xf32, #tpu.memory_space<vmem>>, %arg3: memref<1x32xf32, #tpu.memory_space<vmem>>, %arg4: memref<32x96xbf16, #tpu.memory_space<vmem>>, %arg5: memref<32x32xbf16, #tpu.memory_space<vmem>>, %arg6: memref<1x32xf32, #tpu.memory_space<vmem>>, %arg7: memref<1x32xf32, #tpu.memory_space<vmem>>, %arg8: memref<1x32xf32, #tpu.memory_space<vmem>>, %arg9: memref<32x128xbf16, #tpu.memory_space<vmem>>, %arg10: memref<1x128xf32, #tpu.memory_space<vmem>>, %arg11: memref<128x32xbf16, #tpu.memory_space<vmem>>, %arg12: memref<1x32xf32, #tpu.memory_space<vmem>>, %arg13: memref<2x8x32xf32, #tpu.memory_space<vmem>>) attributes {dimension_semantics = [#tpu.dimension_semantics<parallel>], iteration_bounds = array<i64: 1>, scalar_prefetch = 0 : i64, scratch_operands = 0 : i64, tpu.core_type = #tpu.core_type<tc>, window_params = [{transform_indices = @transform_0, window_bounds = array<i64: 2, 8, 32>}, {pipeline_mode = #tpu.pipeline_mode<synchronous>, transform_indices = @transform_1, window_bounds = array<i64: 1, 32>}, {pipeline_mode = #tpu.pipeline_mode<synchronous>, transform_indices = @transform_2, window_bounds = array<i64: 1, 32>}, {pipeline_mode = #tpu.pipeline_mode<synchronous>, transform_indices = @transform_3, window_bounds = array<i64: 32, 96>}, {pipeline_mode = #tpu.pipeline_mode<synchronous>, transform_indices = @transform_4, window_bounds = array<i64: 32, 32>}, {pipeline_mode = #tpu.pipeline_mode<synchronous>, transform_indices = @transform_5, window_bounds = array<i64: 1, 32>}, {pipeline_mode = #tpu.pipeline_mode<synchronous>, transform_indices = @transform_6, window_bounds = array<i64: 1, 32>}, {pipeline_mode = #tpu.pipeline_mode<synchronous>, transform_indices = @transform_7, window_bounds = array<i64: 1, 32>}, {pipeline_mode = #tpu.pipeline_mode<synchronous>, transform_indices = @transform_8, window_bounds = array<i64: 32, 128>}, {pipeline_mode = #tpu.pipeline_mode<synchronous>, transform_indices = @transform_9, window_bounds = array<i64: 1, 128>}, {pipeline_mode = #tpu.pipeline_mode<synchronous>, transform_indices = @transform_10, window_bounds = array<i64: 128, 32>}, {pipeline_mode = #tpu.pipeline_mode<synchronous>, transform_indices = @transform_11, window_bounds = array<i64: 1, 32>}, {transform_indices = @transform_12, window_bounds = array<i64: 2, 8, 32>}]} {
    %c0 = arith.constant 0 : index
    %c0_0 = arith.constant 0 : index
    %c0_1 = arith.constant 0 : index
    %0 = vector.load %arg1[%c0, %c0_0, %c0_1] : memref<2x8x32xf32, #tpu.memory_space<vmem>>, vector<2x8x32xf32>
    %1 = vector.shape_cast %0 : vector<2x8x32xf32> to vector<16x32xf32>
    %c0_2 = arith.constant 0 : index
    %c0_3 = arith.constant 0 : index
    %2 = vector.load %arg2[%c0_2, %c0_3] : memref<1x32xf32, #tpu.memory_space<vmem>>, vector<1x32xf32>
    %c0_4 = arith.constant 0 : index
    %c0_5 = arith.constant 0 : index
    %3 = vector.load %arg3[%c0_4, %c0_5] : memref<1x32xf32, #tpu.memory_space<vmem>>, vector<1x32xf32>
    %cst = arith.constant dense<0.000000e+00> : vector<16xf32>
    %4 = vector.multi_reduction <add>, %1, %cst [1] : vector<16x32xf32> to vector<16xf32>
    %5 = vector.shape_cast %4 : vector<16xf32> to vector<16x1xf32>
    %cst_6 = arith.constant 3.200000e+01 : f32
    %6 = vector.broadcast %cst_6 : f32 to vector<16x1xf32>
    %7 = arith.divf %5, %6 : vector<16x1xf32>
    %8 = vector.broadcast %7 : vector<16x1xf32> to vector<16x32xf32>
    %9 = arith.subf %1, %8 : vector<16x32xf32>
    %10 = arith.mulf %9, %9 : vector<16x32xf32>
    %cst_7 = arith.constant dense<0.000000e+00> : vector<16xf32>
    %11 = vector.multi_reduction <add>, %10, %cst_7 [1] : vector<16x32xf32> to vector<16xf32>
    %12 = vector.shape_cast %11 : vector<16xf32> to vector<16x1xf32>
    %cst_8 = arith.constant 3.200000e+01 : f32
    %13 = vector.broadcast %cst_8 : f32 to vector<16x1xf32>
    %14 = arith.divf %12, %13 : vector<16x1xf32>
    %15 = vector.broadcast %7 : vector<16x1xf32> to vector<16x32xf32>
    %16 = arith.subf %1, %15 : vector<16x32xf32>
    %cst_9 = arith.constant 9.99999974E-6 : f32
    %17 = vector.broadcast %cst_9 : f32 to vector<16x1xf32>
    %18 = arith.addf %14, %17 : vector<16x1xf32>
    %19 = math.rsqrt %18 : vector<16x1xf32>
    %20 = vector.broadcast %19 : vector<16x1xf32> to vector<16x32xf32>
    %21 = arith.mulf %16, %20 : vector<16x32xf32>
    %22 = vector.broadcast %2 : vector<1x32xf32> to vector<16x32xf32>
    %23 = arith.mulf %21, %22 : vector<16x32xf32>
    %24 = vector.broadcast %3 : vector<1x32xf32> to vector<16x32xf32>
    %25 = arith.addf %23, %24 : vector<16x32xf32>
    %26 = arith.truncf %25 : vector<16x32xf32> to vector<16x32xbf16>
    %c0_10 = arith.constant 0 : index
    %c0_11 = arith.constant 0 : index
    %27 = vector.load %arg4[%c0_10, %c0_11] : memref<32x96xbf16, #tpu.memory_space<vmem>>, vector<32x96xbf16>
    %cst_12 = arith.constant dense<0.000000e+00> : vector<16x96xf32>
    %28 = tpu.matmul %26, %27, %cst_12 {dimension_numbers = #tpu.dot_dimension_numbers<[1], [0], [0], [1], [0, 0, 1, 1], [], []>} : vector<16x32xbf16>, vector<32x96xbf16>, vector<16x96xf32> -> vector<16x96xf32>
    %29 = vector.shape_cast %28 : vector<16x96xf32> to vector<2x8x6x16xf32>
    %30 = tpu.transpose %29, [0, 2, 1, 3] : vector<2x8x6x16xf32> -> vector<2x6x8x16xf32>
    %31 = vector.extract_strided_slice %30 {offsets = [0, 0, 0, 0], sizes = [2, 2, 8, 16], strides = [1, 1, 1, 1]} : vector<2x6x8x16xf32> to vector<2x2x8x16xf32>
    %32 = vector.shape_cast %31 : vector<2x2x8x16xf32> to vector<4x8x16xf32>
    %33 = vector.extract_strided_slice %30 {offsets = [0, 2, 0, 0], sizes = [2, 2, 8, 16], strides = [1, 1, 1, 1]} : vector<2x6x8x16xf32> to vector<2x2x8x16xf32>
    %34 = vector.shape_cast %33 : vector<2x2x8x16xf32> to vector<4x8x16xf32>
    %35 = vector.extract_strided_slice %30 {offsets = [0, 4, 0, 0], sizes = [2, 2, 8, 16], strides = [1, 1, 1, 1]} : vector<2x6x8x16xf32> to vector<2x2x8x16xf32>
    %36 = vector.shape_cast %35 : vector<2x2x8x16xf32> to vector<4x8x16xf32>
    %37 = arith.truncf %32 : vector<4x8x16xf32> to vector<4x8x16xbf16>
    %38 = arith.truncf %34 : vector<4x8x16xf32> to vector<4x8x16xbf16>
    "tpu.trace_start"() <{level = 10 : i32, message = "znd,zmd->znm"}> : () -> ()
    %cst_13 = arith.constant dense<0.000000e+00> : vector<4x8x8xf32>
    %39 = tpu.matmul %37, %38, %cst_13 {dimension_numbers = #tpu.dot_dimension_numbers<[2], [2], [1], [1], [0, 0, 0, 1, 1, 1], [0], [0]>} : vector<4x8x16xbf16>, vector<4x8x16xbf16>, vector<4x8x8xf32> -> vector<4x8x8xf32>
    "tpu.trace_stop"() : () -> ()
    %cst_14 = arith.constant dense<0xFF800000> : vector<4x8xf32>
    %40 = vector.multi_reduction <maximumf>, %39, %cst_14 [2] : vector<4x8x8xf32> to vector<4x8xf32>
    %41 = vector.shape_cast %40 : vector<4x8xf32> to vector<4x8x1xf32>
    %42 = vector.broadcast %41 : vector<4x8x1xf32> to vector<4x8x8xf32>
    %43 = arith.subf %39, %42 : vector<4x8x8xf32>
    %44 = math.exp %43 : vector<4x8x8xf32>
    %cst_15 = arith.constant dense<0.000000e+00> : vector<4x8xf32>
    %45 = vector.multi_reduction <add>, %44, %cst_15 [2] : vector<4x8x8xf32> to vector<4x8xf32>
    %46 = vector.shape_cast %45 : vector<4x8xf32> to vector<4x8x1xf32>
    %47 = arith.truncf %44 : vector<4x8x8xf32> to vector<4x8x8xbf16>
    %48 = arith.truncf %36 : vector<4x8x16xf32> to vector<4x8x16xbf16>
    "tpu.trace_start"() <{level = 10 : i32, message = "znm,zmd->znd"}> : () -> ()
    %cst_16 = arith.constant dense<0.000000e+00> : vector<4x8x16xf32>
    %49 = tpu.matmul %47, %48, %cst_16 {dimension_numbers = #tpu.dot_dimension_numbers<[2], [1], [1], [2], [0, 0, 0, 1, 1, 2], [0], [0]>} : vector<4x8x8xbf16>, vector<4x8x16xbf16>, vector<4x8x16xf32> -> vector<4x8x16xf32>
    "tpu.trace_stop"() : () -> ()
    %50 = tpu.reciprocal %46 {approx = true} : vector<4x8x1xf32> -> vector<4x8x1xf32>
    %51 = vector.broadcast %50 : vector<4x8x1xf32> to vector<4x8x16xf32>
    %52 = arith.mulf %49, %51 : vector<4x8x16xf32>
    %53 = vector.shape_cast %52 : vector<4x8x16xf32> to vector<2x2x8x16xf32>
    %54 = tpu.transpose %53, [0, 2, 1, 3] : vector<2x2x8x16xf32> -> vector<2x8x2x16xf32>
    %55 = vector.shape_cast %54 : vector<2x8x2x16xf32> to vector<16x32xf32>
    %56 = arith.truncf %55 : vector<16x32xf32> to vector<16x32xbf16>
    %c0_17 = arith.constant 0 : index
    %c0_18 = arith.constant 0 : index
    %57 = vector.load %arg5[%c0_17, %c0_18] : memref<32x32xbf16, #tpu.memory_space<vmem>>, vector<32x32xbf16>
    %cst_19 = arith.constant dense<0.000000e+00> : vector<16x32xf32>
    %58 = tpu.matmul %56, %57, %cst_19 {dimension_numbers = #tpu.dot_dimension_numbers<[1], [0], [0], [1], [0, 0, 1, 1], [], []>} : vector<16x32xbf16>, vector<32x32xbf16>, vector<16x32xf32> -> vector<16x32xf32>
    %c0_20 = arith.constant 0 : index
    %c0_21 = arith.constant 0 : index
    %59 = vector.load %arg6[%c0_20, %c0_21] : memref<1x32xf32, #tpu.memory_space<vmem>>, vector<1x32xf32>
    %60 = vector.broadcast %59 : vector<1x32xf32> to vector<16x32xf32>
    %61 = arith.addf %58, %60 : vector<16x32xf32>
    %62 = arith.addf %61, %1 : vector<16x32xf32>
    %c0_22 = arith.constant 0 : index
    %c0_23 = arith.constant 0 : index
    %63 = vector.load %arg7[%c0_22, %c0_23] : memref<1x32xf32, #tpu.memory_space<vmem>>, vector<1x32xf32>
    %c0_24 = arith.constant 0 : index
    %c0_25 = arith.constant 0 : index
    %64 = vector.load %arg8[%c0_24, %c0_25] : memref<1x32xf32, #tpu.memory_space<vmem>>, vector<1x32xf32>
    %cst_26 = arith.constant dense<0.000000e+00> : vector<16xf32>
    %65 = vector.multi_reduction <add>, %62, %cst_26 [1] : vector<16x32xf32> to vector<16xf32>
    %66 = vector.shape_cast %65 : vector<16xf32> to vector<16x1xf32>
    %cst_27 = arith.constant 3.200000e+01 : f32
    %67 = vector.broadcast %cst_27 : f32 to vector<16x1xf32>
    %68 = arith.divf %66, %67 : vector<16x1xf32>
    %69 = vector.broadcast %68 : vector<16x1xf32> to vector<16x32xf32>
    %70 = arith.subf %62, %69 : vector<16x32xf32>
    %71 = arith.mulf %70, %70 : vector<16x32xf32>
    %cst_28 = arith.constant dense<0.000000e+00> : vector<16xf32>
    %72 = vector.multi_reduction <add>, %71, %cst_28 [1] : vector<16x32xf32> to vector<16xf32>
    %73 = vector.shape_cast %72 : vector<16xf32> to vector<16x1xf32>
    %cst_29 = arith.constant 3.200000e+01 : f32
    %74 = vector.broadcast %cst_29 : f32 to vector<16x1xf32>
    %75 = arith.divf %73, %74 : vector<16x1xf32>
    %76 = vector.broadcast %68 : vector<16x1xf32> to vector<16x32xf32>
    %77 = arith.subf %62, %76 : vector<16x32xf32>
    %cst_30 = arith.constant 9.99999974E-6 : f32
    %78 = vector.broadcast %cst_30 : f32 to vector<16x1xf32>
    %79 = arith.addf %75, %78 : vector<16x1xf32>
    %80 = math.rsqrt %79 : vector<16x1xf32>
    %81 = vector.broadcast %80 : vector<16x1xf32> to vector<16x32xf32>
    %82 = arith.mulf %77, %81 : vector<16x32xf32>
    %83 = vector.broadcast %63 : vector<1x32xf32> to vector<16x32xf32>
    %84 = arith.mulf %82, %83 : vector<16x32xf32>
    %85 = vector.broadcast %64 : vector<1x32xf32> to vector<16x32xf32>
    %86 = arith.addf %84, %85 : vector<16x32xf32>
    %87 = arith.truncf %86 : vector<16x32xf32> to vector<16x32xbf16>
    %c0_31 = arith.constant 0 : index
    %c0_32 = arith.constant 0 : index
    %88 = vector.load %arg9[%c0_31, %c0_32] : memref<32x128xbf16, #tpu.memory_space<vmem>>, vector<32x128xbf16>
    %cst_33 = arith.constant dense<0.000000e+00> : vector<16x128xf32>
    %89 = tpu.matmul %87, %88, %cst_33 {dimension_numbers = #tpu.dot_dimension_numbers<[1], [0], [0], [1], [0, 0, 1, 1], [], []>} : vector<16x32xbf16>, vector<32x128xbf16>, vector<16x128xf32> -> vector<16x128xf32>
    %c0_34 = arith.constant 0 : index
    %c0_35 = arith.constant 0 : index
    %90 = vector.load %arg10[%c0_34, %c0_35] : memref<1x128xf32, #tpu.memory_space<vmem>>, vector<1x128xf32>
    %91 = vector.broadcast %90 : vector<1x128xf32> to vector<16x128xf32>
    %92 = arith.addf %89, %91 : vector<16x128xf32>
    %cst_36 = arith.constant 5.000000e-01 : f32
    %93 = vector.broadcast %cst_36 : f32 to vector<16x128xf32>
    %94 = arith.mulf %93, %92 : vector<16x128xf32>
    %cst_37 = arith.constant 0.707106769 : f32
    %95 = vector.broadcast %cst_37 : f32 to vector<16x128xf32>
    %96 = arith.mulf %92, %95 : vector<16x128xf32>
    %97 = math.erf %96 : vector<16x128xf32>
    %cst_38 = arith.constant 1.000000e+00 : f32
    %98 = vector.broadcast %cst_38 : f32 to vector<16x128xf32>
    %99 = arith.addf %98, %97 : vector<16x128xf32>
    %100 = arith.mulf %94, %99 : vector<16x128xf32>
    %101 = arith.truncf %100 : vector<16x128xf32> to vector<16x128xbf16>
    %c0_39 = arith.constant 0 : index
    %c0_40 = arith.constant 0 : index
    %102 = vector.load %arg11[%c0_39, %c0_40] : memref<128x32xbf16, #tpu.memory_space<vmem>>, vector<128x32xbf16>
    %cst_41 = arith.constant dense<0.000000e+00> : vector<16x32xf32>
    %103 = tpu.matmul %101, %102, %cst_41 {dimension_numbers = #tpu.dot_dimension_numbers<[1], [0], [0], [1], [0, 0, 1, 1], [], []>} : vector<16x128xbf16>, vector<128x32xbf16>, vector<16x32xf32> -> vector<16x32xf32>
    %c0_42 = arith.constant 0 : index
    %c0_43 = arith.constant 0 : index
    %104 = vector.load %arg12[%c0_42, %c0_43] : memref<1x32xf32, #tpu.memory_space<vmem>>, vector<1x32xf32>
    %105 = vector.broadcast %104 : vector<1x32xf32> to vector<16x32xf32>
    %106 = arith.addf %103, %105 : vector<16x32xf32>
    %107 = arith.addf %106, %62 : vector<16x32xf32>
    %108 = vector.shape_cast %107 : vector<16x32xf32> to vector<2x8x32xf32>
    %c0_44 = arith.constant 0 : index
    %c0_45 = arith.constant 0 : index
    %c0_46 = arith.constant 0 : index
    %109 = vector.load %arg13[%c0_44, %c0_45, %c0_46] : memref<2x8x32xf32, #tpu.memory_space<vmem>>, vector<2x8x32xf32>
    tpu.vector_store %arg13[%c0_44, %c0_45, %c0_46], %108 {strides = array<i32>} : memref<2x8x32xf32, #tpu.memory_space<vmem>>, vector<2x8x32xf32>,
    return
  }
  func.func @transform_0(%arg0: i32) -> (i32, i32, i32) {
    %c0_i32 = arith.constant 0 : i32
    %c0_i32_0 = arith.constant 0 : i32
    %c0_i32_1 = arith.constant 0 : i32
    return %arg0, %c0_i32, %c0_i32_0 : i32, i32, i32
  }
  func.func @transform_1(%arg0: i32) -> (i32, i32) {
    %c0_i32 = arith.constant 0 : i32
    %c0_i32_0 = arith.constant 0 : i32
    %c0_i32_1 = arith.constant 0 : i32
    return %c0_i32, %c0_i32_0 : i32, i32
  }
  func.func @transform_2(%arg0: i32) -> (i32, i32) {
    %c0_i32 = arith.constant 0 : i32
    %c0_i32_0 = arith.constant 0 : i32
    %c0_i32_1 = arith.constant 0 : i32
    return %c0_i32, %c0_i32_0 : i32, i32
  }
  func.func @transform_3(%arg0: i32) -> (i32, i32) {
    %c0_i32 = arith.constant 0 : i32
    %c0_i32_0 = arith.constant 0 : i32
    %c0_i32_1 = arith.constant 0 : i32
    return %c0_i32, %c0_i32_0 : i32, i32
  }
  func.func @transform_4(%arg0: i32) -> (i32, i32) {
    %c0_i32 = arith.constant 0 : i32
    %c0_i32_0 = arith.constant 0 : i32
    %c0_i32_1 = arith.constant 0 : i32
    return %c0_i32, %c0_i32_0 : i32, i32
  }
  func.func @transform_5(%arg0: i32) -> (i32, i32) {
    %c0_i32 = arith.constant 0 : i32
    %c0_i32_0 = arith.constant 0 : i32
    %c0_i32_1 = arith.constant 0 : i32
    return %c0_i32, %c0_i32_0 : i32, i32
  }
  func.func @transform_6(%arg0: i32) -> (i32, i32) {
    %c0_i32 = arith.constant 0 : i32
    %c0_i32_0 = arith.constant 0 : i32
    %c0_i32_1 = arith.constant 0 : i32
    return %c0_i32, %c0_i32_0 : i32, i32
  }
  func.func @transform_7(%arg0: i32) -> (i32, i32) {
    %c0_i32 = arith.constant 0 : i32
    %c0_i32_0 = arith.constant 0 : i32
    %c0_i32_1 = arith.constant 0 : i32
    return %c0_i32, %c0_i32_0 : i32, i32
  }
  func.func @transform_8(%arg0: i32) -> (i32, i32) {
    %c0_i32 = arith.constant 0 : i32
    %c0_i32_0 = arith.constant 0 : i32
    %c0_i32_1 = arith.constant 0 : i32
    return %c0_i32, %c0_i32_0 : i32, i32
  }
  func.func @transform_9(%arg0: i32) -> (i32, i32) {
    %c0_i32 = arith.constant 0 : i32
    %c0_i32_0 = arith.constant 0 : i32
    %c0_i32_1 = arith.constant 0 : i32
    return %c0_i32, %c0_i32_0 : i32, i32
  }
  func.func @transform_10(%arg0: i32) -> (i32, i32) {
    %c0_i32 = arith.constant 0 : i32
    %c0_i32_0 = arith.constant 0 : i32
    %c0_i32_1 = arith.constant 0 : i32
    return %c0_i32, %c0_i32_0 : i32, i32
  }
  func.func @transform_11(%arg0: i32) -> (i32, i32) {
    %c0_i32 = arith.constant 0 : i32
    %c0_i32_0 = arith.constant 0 : i32
    %c0_i32_1 = arith.constant 0 : i32
    return %c0_i32, %c0_i32_0 : i32, i32
  }
  func.func @transform_12(%arg0: i32) -> (i32, i32, i32) {
    %c0_i32 = arith.constant 0 : i32
    %c0_i32_0 = arith.constant 0 : i32
    %c0_i32_1 = arith.constant 0 : i32
    return %arg0, %c0_i32, %c0_i32_0 : i32, i32, i32
  }
}

</mosaic_0001>

<llo_original>
// kernel: tpu_custom_call.1
$region0: #{tpu_custom_call.1}
  #allocation0 [shape = 'u32[]', space=smem, size = 0x4, offset = 0x4, fixed_abs, tag = 'smem constant byte address 0x4 - core index']
  #allocation1 [shape = 'u32[72,128]{1,0:T(1,128)}', space=vmem, size = 0x9000, scoped, tag = 'internal scratch']
  %s0 = inlined_call_operand.vmem [shape: f32[2,8,32], index: 0, kind: input, shape index: {}]
  %s1 = inlined_call_operand.vmem [shape: f32[1,32], index: 1, kind: input, shape index: {}]
  %s2 = inlined_call_operand.vmem [shape: f32[1,32], index: 2, kind: input, shape index: {}]
  %s3 = inlined_call_operand.vmem [shape: bf16[32,96], index: 3, kind: input, shape index: {}]
  %s4 = inlined_call_operand.vmem [shape: bf16[32,32], index: 4, kind: input, shape index: {}]
  %s5 = inlined_call_operand.vmem [shape: f32[1,32], index: 5, kind: input, shape index: {}]
  %s6 = inlined_call_operand.vmem [shape: f32[1,32], index: 6, kind: input, shape index: {}]
  %s7 = inlined_call_operand.vmem [shape: f32[1,32], index: 7, kind: input, shape index: {}]
  %s8 = inlined_call_operand.vmem [shape: bf16[32,128], index: 8, kind: input, shape index: {}]
  %s9 = inlined_call_operand.vmem [shape: f32[1,128], index: 9, kind: input, shape index: {}]
  %s10 = inlined_call_operand.vmem [shape: bf16[128,32], index: 10, kind: input, shape index: {}]
  %s11 = inlined_call_operand.vmem [shape: f32[1,32], index: 11, kind: input, shape index: {}]
  %s12 = inlined_call_operand.hbm [shape: f32[2,8,32], index: 12, kind: output, shape index: {}]
  %s13 = sld [smem:[#allocation0]]
  $region58: #{tpu_custom_call.1} parent=0
    _
  %s15 = ssub.s32 1, %s13
  %s16 = scalar_select 0, %s15, %s13
  $region1: #{tpu_custom_call.1} parent=0
    #allocation2 [shape = 'u8[8192]{0}', space=vmem, size = 0x2000, scoped, tag = 'output window, operand 0, single buffered']
    #allocation3 [shape = 's32[1]{0}', space=sflag, size = 0x4, scoped, tag = 'scoped memory for tpu_custom_call.1']
    %17 = vsyncpa [#allocation3], 0
    // Predicated region
    $region2: #{tpu_custom_call.1} parent=1 // pred_check
      _
    $region3: #{tpu_custom_call.1} parent=1 // pred_check_branch
      %19 = sbr.rel (0) target = $region5
    $region4: #{tpu_custom_call.1} parent=1 // pred_region
      _
    $region5: #{tpu_custom_call.1} parent=1 // pred_fallthru
      _
    // Predicated region
    $region6: #{tpu_custom_call.1} parent=1 // pred_check
      _
    $region7: #{tpu_custom_call.1} parent=1 // pred_check_branch
      %21 = sbr.rel (0) target = $region9
    $region8: #{tpu_custom_call.1} parent=1 // pred_region
      _
    $region9: #{tpu_custom_call.1} parent=1 // pred_fallthru
      _
    // Predicated region
    $region10: #{tpu_custom_call.1} parent=1 // pred_check
      _
    $region11: #{tpu_custom_call.1} parent=1 // pred_check_branch
      %23 = sbr.rel (0) target = $region13
    $region12: #{tpu_custom_call.1} parent=1 // pred_region
      _
    $region13: #{tpu_custom_call.1} parent=1 // pred_fallthru
      _
    // Predicated region
    $region14: #{tpu_custom_call.1} parent=1 // pred_check
      _
    $region15: #{tpu_custom_call.1} parent=1 // pred_check_branch
      %25 = sbr.rel (0) target = $region17
    $region16: #{tpu_custom_call.1} parent=1 // pred_region
      _
    $region17: #{tpu_custom_call.1} parent=1 // pred_fallthru
      _
    // Predicated region
    $region18: #{tpu_custom_call.1} parent=1 // pred_check
      _
    $region19: #{tpu_custom_call.1} parent=1 // pred_check_branch
      %27 = sbr.rel (0) target = $region21
    $region20: #{tpu_custom_call.1} parent=1 // pred_region
      _
    $region21: #{tpu_custom_call.1} parent=1 // pred_fallthru
      _
    // Predicated region
    $region22: #{tpu_custom_call.1} parent=1 // pred_check
      _
    $region23: #{tpu_custom_call.1} parent=1 // pred_check_branch
      %29 = sbr.rel (0) target = $region25
    $region24: #{tpu_custom_call.1} parent=1 // pred_region
      _
    $region25: #{tpu_custom_call.1} parent=1 // pred_fallthru
      _
    // Predicated region
    $region26: #{tpu_custom_call.1} parent=1 // pred_check
      _
    $region27: #{tpu_custom_call.1} parent=1 // pred_check_branch
      %31 = sbr.rel (0) target = $region29
    $region28: #{tpu_custom_call.1} parent=1 // pred_region
      _
    $region29: #{tpu_custom_call.1} parent=1 // pred_fallthru
      _
    // Predicated region
    $region30: #{tpu_custom_call.1} parent=1 // pred_check
      _
    $region31: #{tpu_custom_call.1} parent=1 // pred_check_branch
      %33 = sbr.rel (0) target = $region33
    $region32: #{tpu_custom_call.1} parent=1 // pred_region
      _
    $region33: #{tpu_custom_call.1} parent=1 // pred_fallthru
      _
    // Predicated region
    $region34: #{tpu_custom_call.1} parent=1 // pred_check
      _
    $region35: #{tpu_custom_call.1} parent=1 // pred_check_branch
      %35 = sbr.rel (0) target = $region37
    $region36: #{tpu_custom_call.1} parent=1 // pred_region
      _
    $region37: #{tpu_custom_call.1} parent=1 // pred_fallthru
      _
    // Predicated region
    $region38: #{tpu_custom_call.1} parent=1 // pred_check
      _
    $region39: #{tpu_custom_call.1} parent=1 // pred_check_branch
      %37 = sbr.rel (0) target = $region41
    $region40: #{tpu_custom_call.1} parent=1 // pred_region
      _
    $region41: #{tpu_custom_call.1} parent=1 // pred_fallthru
      _
    // Predicated region
    $region42: #{tpu_custom_call.1} parent=1 // pred_check
      _
    $region43: #{tpu_custom_call.1} parent=1 // pred_check_branch
      %39 = sbr.rel (0) target = $region45
    $region44: #{tpu_custom_call.1} parent=1 // pred_region
      _
    $region45: #{tpu_custom_call.1} parent=1 // pred_fallthru
      _
    // Predicated region
    $region46: #{tpu_custom_call.1} parent=1 // pred_check
      _
    $region47: #{tpu_custom_call.1} parent=1 // pred_check_branch
      %41 = sbr.rel (0) target = $region49
    $region48: #{tpu_custom_call.1} parent=1 // pred_region
      _
    $region49: #{tpu_custom_call.1} parent=1 // pred_fallthru
      _
    %v43 = vld [vmem:[%s0] sm:$0xff]
    %v44 = vld [vmem:[%s0 + $0x8] sm:$0xff]
    %v45 = vld [vmem:[%s1] sm:$0x1]
    %v46 = vld [vmem:[%s2] sm:$0x1]
    %vm47 = vcmask 261120
    %v48 = vsel %vm47, %v43, 0.0
    %49 = vadd.xlane.f32.xlu0 %v48
    %v50 = vpop.xlane.xlu0 %49
    %v51 = vsel %vm47, %v44, 0.0
    %52 = vadd.xlane.f32.xlu0 %v51
    %v53 = vpop.xlane.xlu0 %52
    %v54 = vrcp.pop 32.0
    %v55 = vmul.f32 32.0, %v54
    %v56 = vsub.f32 1.0, %v55
    %v57 = vmul.f32 %v54, %v56
    %v58 = vadd.f32 %v54, %v57
    %vm59 = vweird.f32 %v54
    %v60 = vsel %vm59, %v54, %v58
    %v61 = vmul.f32 %v50, %v60
    %v62 = vmul.f32 %v53, %v60
    %v63 = vsub.f32 %v43, %v61
    %v64 = vsub.f32 %v44, %v62
    %v65 = vmul.f32 %v63, %v63
    %v66 = vmul.f32 %v64, %v64
    %v67 = vsel %vm47, %v65, 0.0
    %68 = vadd.xlane.f32.xlu0 %v67
    %v69 = vpop.xlane.xlu0 %68
    %v70 = vsel %vm47, %v66, 0.0
    %71 = vadd.xlane.f32.xlu0 %v70
    %v72 = vpop.xlane.xlu0 %71
    %v73 = vmul.f32 %v69, %v60
    %v74 = vmul.f32 %v72, %v60
    %v75 = vadd.f32 %v73, 1e-05
    %v76 = vadd.f32 %v74, 1e-05
    %v77 = vrsqrt.pop %v75
    %v78 = vmul.f32 %v77, %v75
    %v79 = vmul.f32 %v78, %v77
    %v80 = vmul.f32 0.5, %v79
    %v81 = vsub.f32 1.5, %v80
    %v82 = vmul.f32 %v77, %v81
    %vm83 = vweird.f32 %v75
    %vm84 = vweird.f32 %v77
    %vm85 = vmor %vm83, %vm84
    %v86 = vsel %vm85, %v77, %v82
    %v87 = vrsqrt.pop %v76
    %v88 = vmul.f32 %v87, %v76
    %v89 = vmul.f32 %v88, %v87
    %v90 = vmul.f32 0.5, %v89
    %v91 = vsub.f32 1.5, %v90
    %v92 = vmul.f32 %v87, %v91
    %vm93 = vweird.f32 %v76
    %vm94 = vweird.f32 %v87
    %vm95 = vmor %vm93, %vm94
    %v96 = vsel %vm95, %v87, %v92
    %v97 = vmul.f32 %v63, %v86
    %v98 = vmul.f32 %v64, %v96
    %v100 = vperm.slane %v45, 0
    %v102 = vmul.f32 %v97, %v100
    %v103 = vmul.f32 %v98, %v100
    %v105 = vperm.slane %v46, 0
    %v107 = vadd.f32 %v102, %v105
    %v108 = vadd.f32 %v103, %v105
    %v109 = vpack.c.bf16 %v108, %v107
    %v110 = vld [vmem:[%s3] sm:$0xf]
    %v111 = vld [vmem:[%s3 + $0x4] sm:$0xf]
    %v112 = vld [vmem:[%s3 + $0x8] sm:$0xf]
    %v113 = vld [vmem:[%s3 + $0xc] sm:$0xf]
    %v118 = vunpack.c.l.b16 %v110
    %v119 = vunpack.c.l.b16 %v111
    %v120 = vunpack.c.l.b16 %v112
    %v121 = vunpack.c.l.b16 %v113
    %v122 = vpack.c.b16 %v119, %v118
    %v123 = vpack.c.b16 %v121, %v120
    %v127 = vsel %vm47, %v109, 0
    %129 = vmatpush.bf16.msra.mxu0 0
    %130 = vmatpush.bf16.msra.mxu0 0
    %131 = vmatpush.bf16.msra.mxu0 0
    %132 = vmatpush.bf16.msra.mxu0 0
    %133 = vmatpush.bf16.msra.mxu0 0
    %134 = vmatpush.bf16.msra.mxu0 0
    %135 = vmatpush.bf16.msra.mxu0 %v123
    %136 = vmatpush.bf16.msra.mxu0 %v122
    %137 = vmatmul.bf16.gmra.mxu0 %v127
    %v138 = vpop.f32.mrf.mxu0
    %v139 = vadd.f32 0.0, %v138
    %v140 = vpop.f32.mrf.mxu0
    %v141 = vadd.f32 0.0, %v140
    %142 = vdwg.mxu0
    %145 = vrot.lane.b32.xlu0 %v139, 112
    %v146 = vpop.permute.xlu0 %145
    %147 = vrot.lane.b32.xlu0 %v141, 112
    %v148 = vpop.permute.xlu0 %147
    %151 = vrot.lane.b32.xlu0 %v139, 96
    %v152 = vpop.permute.xlu0 %151
    %153 = vrot.lane.b32.xlu0 %v141, 96
    %v154 = vpop.permute.xlu0 %153
    %157 = vrot.lane.b32.xlu0 %v139, 80
    %v158 = vpop.permute.xlu0 %157
    %159 = vrot.lane.b32.xlu0 %v141, 80
    %v160 = vpop.permute.xlu0 %159
    %163 = vrot.lane.b32.xlu0 %v139, 64
    %v164 = vpop.permute.xlu0 %163
    %165 = vrot.lane.b32.xlu0 %v141, 64
    %v166 = vpop.permute.xlu0 %165
    %169 = vrot.lane.b32.xlu0 %v139, 48
    %v170 = vpop.permute.xlu0 %169
    %171 = vrot.lane.b32.xlu0 %v141, 48
    %v172 = vpop.permute.xlu0 %171
    %v175 = vrot.slane %v152, 4
    %vm176 = vcmask 1047556
    %v177 = vsel %vm176, %v175, %v139
    %v178 = vrot.slane %v139, 4
    %v179 = vsel %vm176, %v152, %v178
    %v181 = vunpack.c.l.s4 1983009808
    %v182 = vunpack.c.0.s8 %v181
    %v183 = vperm.slane %v177, %v182
    %v185 = vunpack.c.l.s4 1983009808
    %v186 = vunpack.c.0.s8 %v185
    %v187 = vperm.slane %v179, %v186
    %v188 = vrot.slane %v158, 4
    %v189 = vsel %vm176, %v188, %v146
    %v190 = vrot.slane %v146, 4
    %v191 = vsel %vm176, %v158, %v190
    %v193 = vunpack.c.l.s4 1983009808
    %v194 = vunpack.c.0.s8 %v193
    %v195 = vperm.slane %v189, %v194
    %v197 = vunpack.c.l.s4 1983009808
    %v198 = vunpack.c.0.s8 %v197
    %v199 = vperm.slane %v191, %v198
    %v200 = vrot.slane %v164, 4
    %v201 = vsel %vm176, 0.0, %v200
    %v203 = vunpack.c.l.s4 1983009808
    %v204 = vunpack.c.0.s8 %v203
    %v205 = vperm.slane %v164, %v204
    %v207 = vunpack.c.l.s4 1983009808
    %v208 = vunpack.c.0.s8 %v207
    %v209 = vperm.slane %v201, %v208
    %v210 = vrot.slane %v170, 4
    %v211 = vsel %vm176, 0.0, %v210
    %v213 = vunpack.c.l.s4 1983009808
    %v214 = vunpack.c.0.s8 %v213
    %v215 = vperm.slane %v170, %v214
    %v217 = vunpack.c.l.s4 1983009808
    %v218 = vunpack.c.0.s8 %v217
    %v219 = vperm.slane %v211, %v218
    %v220 = vrot.slane %v195, 4
    %v221 = vsel %vm176, %v220, %v183
    %v222 = vrot.slane %v183, 4
    %v223 = vsel %vm176, %v195, %v222
    %v225 = vunpack.c.l.s4 1934713408
    %v226 = vunpack.c.0.s8 %v225
    %v227 = vperm.slane %v221, %v226
    %v229 = vunpack.c.l.s4 1934713408
    %v230 = vunpack.c.0.s8 %v229
    %v231 = vperm.slane %v223, %v230
    %v232 = vrot.slane %v199, 4
    %v233 = vsel %vm176, %v232, %v187
    %v234 = vrot.slane %v187, 4
    %v235 = vsel %vm176, %v199, %v234
    %v237 = vunpack.c.l.s4 1934713408
    %v238 = vunpack.c.0.s8 %v237
    %v239 = vperm.slane %v233, %v238
    %v241 = vunpack.c.l.s4 1934713408
    %v242 = vunpack.c.0.s8 %v241
    %v243 = vperm.slane %v235, %v242
    %v244 = vrot.slane %v215, 4
    %v245 = vsel %vm176, %v244, %v205
    %v246 = vrot.slane %v205, 4
    %v247 = vsel %vm176, %v215, %v246
    %v249 = vunpack.c.l.s4 1934713408
    %v250 = vunpack.c.0.s8 %v249
    %v251 = vperm.slane %v245, %v250
    %v253 = vunpack.c.l.s4 1934713408
    %v254 = vunpack.c.0.s8 %v253
    %v255 = vperm.slane %v247, %v254
    %v256 = vrot.slane %v219, 4
    %v257 = vsel %vm176, %v256, %v209
    %v258 = vrot.slane %v209, 4
    %v259 = vsel %vm176, %v219, %v258
    %v261 = vunpack.c.l.s4 1934713408
    %v262 = vunpack.c.0.s8 %v261
    %v263 = vperm.slane %v257, %v262
    %v265 = vunpack.c.l.s4 1934713408
    %v266 = vunpack.c.0.s8 %v265
    %v267 = vperm.slane %v259, %v266
    %v268 = vrot.slane %v251, 4
    %v269 = vsel %vm176, %v268, %v227
    %v270 = vrot.slane %v227, 4
    %v271 = vsel %vm176, %v251, %v270
    %v272 = vrot.slane %v255, 4
    %v273 = vsel %vm176, %v272, %v231
    %v274 = vrot.slane %v231, 4
    %v275 = vsel %vm176, %v255, %v274
    %v276 = vrot.slane %v263, 4
    %v277 = vsel %vm176, %v276, %v239
    %v278 = vrot.slane %v239, 4
    %v279 = vsel %vm176, %v263, %v278
    %v280 = vrot.slane %v267, 4
    %v281 = vsel %vm176, %v280, %v243
    %v282 = vrot.slane %v243, 4
    %v283 = vsel %vm176, %v267, %v282
    %v284 = vrot.slane %v154, 4
    %v285 = vsel %vm176, %v284, %v141
    %v286 = vrot.slane %v141, 4
    %v287 = vsel %vm176, %v154, %v286
    %v289 = vunpack.c.l.s4 1983009808
    %v290 = vunpack.c.0.s8 %v289
    %v291 = vperm.slane %v285, %v290
    %v293 = vunpack.c.l.s4 1983009808
    %v294 = vunpack.c.0.s8 %v293
    %v295 = vperm.slane %v287, %v294
    %v296 = vrot.slane %v160, 4
    %v297 = vsel %vm176, %v296, %v148
    %v298 = vrot.slane %v148, 4
    %v299 = vsel %vm176, %v160, %v298
    %v301 = vunpack.c.l.s4 1983009808
    %v302 = vunpack.c.0.s8 %v301
    %v303 = vperm.slane %v297, %v302
    %v305 = vunpack.c.l.s4 1983009808
    %v306 = vunpack.c.0.s8 %v305
    %v307 = vperm.slane %v299, %v306
    %v308 = vrot.slane %v166, 4
    %v309 = vsel %vm176, 0.0, %v308
    %v311 = vunpack.c.l.s4 1983009808
    %v312 = vunpack.c.0.s8 %v311
    %v313 = vperm.slane %v166, %v312
    %v315 = vunpack.c.l.s4 1983009808
    %v316 = vunpack.c.0.s8 %v315
    %v317 = vperm.slane %v309, %v316
    %v318 = vrot.slane %v172, 4
    %v319 = vsel %vm176, 0.0, %v318
    %v321 = vunpack.c.l.s4 1983009808
    %v322 = vunpack.c.0.s8 %v321
    %v323 = vperm.slane %v172, %v322
    %v325 = vunpack.c.l.s4 1983009808
    %v326 = vunpack.c.0.s8 %v325
    %v327 = vperm.slane %v319, %v326
    %v328 = vrot.slane %v303, 4
    %v329 = vsel %vm176, %v328, %v291
    %v330 = vrot.slane %v291, 4
    %v331 = vsel %vm176, %v303, %v330
    %v333 = vunpack.c.l.s4 1934713408
    %v334 = vunpack.c.0.s8 %v333
    %v335 = vperm.slane %v329, %v334
    %v337 = vunpack.c.l.s4 1934713408
    %v338 = vunpack.c.0.s8 %v337
    %v339 = vperm.slane %v331, %v338
    %v340 = vrot.slane %v307, 4
    %v341 = vsel %vm176, %v340, %v295
    %v342 = vrot.slane %v295, 4
    %v343 = vsel %vm176, %v307, %v342
    %v345 = vunpack.c.l.s4 1934713408
    %v346 = vunpack.c.0.s8 %v345
    %v347 = vperm.slane %v341, %v346
    %v349 = vunpack.c.l.s4 1934713408
    %v350 = vunpack.c.0.s8 %v349
    %v351 = vperm.slane %v343, %v350
    %v352 = vrot.slane %v323, 4
    %v353 = vsel %vm176, %v352, %v313
    %v354 = vrot.slane %v313, 4
    %v355 = vsel %vm176, %v323, %v354
    %v357 = vunpack.c.l.s4 1934713408
    %v358 = vunpack.c.0.s8 %v357
    %v359 = vperm.slane %v353, %v358
    %v361 = vunpack.c.l.s4 1934713408
    %v362 = vunpack.c.0.s8 %v361
    %v363 = vperm.slane %v355, %v362
    %v364 = vrot.slane %v327, 4
    %v365 = vsel %vm176, %v364, %v317
    %v366 = vrot.slane %v317, 4
    %v367 = vsel %vm176, %v327, %v366
    %v369 = vunpack.c.l.s4 1934713408
    %v370 = vunpack.c.0.s8 %v369
    %v371 = vperm.slane %v365, %v370
    %v373 = vunpack.c.l.s4 1934713408
    %v374 = vunpack.c.0.s8 %v373
    %v375 = vperm.slane %v367, %v374
    %v376 = vrot.slane %v359, 4
    %v377 = vsel %vm176, %v376, %v335
    %v378 = vrot.slane %v335, 4
    %v379 = vsel %vm176, %v359, %v378
    %v380 = vrot.slane %v363, 4
    %v381 = vsel %vm176, %v380, %v339
    %v382 = vrot.slane %v339, 4
    %v383 = vsel %vm176, %v363, %v382
    %v384 = vrot.slane %v371, 4
    %v385 = vsel %vm176, %v384, %v347
    %v386 = vrot.slane %v347, 4
    %v387 = vsel %vm176, %v371, %v386
    %v388 = vrot.slane %v375, 4
    %v389 = vsel %vm176, %v388, %v351
    %v390 = vrot.slane %v351, 4
    %v391 = vsel %vm176, %v375, %v390
    %v392 = vrot.slane %v273, 4
    %v393 = vsel %vm176, %v392, %v269
    %v394 = vrot.slane %v269, 4
    %v395 = vsel %vm176, %v273, %v394
    %v397 = vunpack.c.l.s4 1983009808
    %v398 = vunpack.c.0.s8 %v397
    %v399 = vperm.slane %v393, %v398
    %v401 = vunpack.c.l.s4 1983009808
    %v402 = vunpack.c.0.s8 %v401
    %v403 = vperm.slane %v395, %v402
    %v404 = vrot.slane %v275, 4
    %v405 = vsel %vm176, %v404, %v271
    %v406 = vrot.slane %v271, 4
    %v407 = vsel %vm176, %v275, %v406
    %v409 = vunpack.c.l.s4 1983009808
    %v410 = vunpack.c.0.s8 %v409
    %v411 = vperm.slane %v405, %v410
    %v413 = vunpack.c.l.s4 1983009808
    %v414 = vunpack.c.0.s8 %v413
    %v415 = vperm.slane %v407, %v414
    %v416 = vrot.slane %v281, 4
    %v417 = vsel %vm176, %v416, %v277
    %v418 = vrot.slane %v277, 4
    %v419 = vsel %vm176, %v281, %v418
    %v421 = vunpack.c.l.s4 1983009808
    %v422 = vunpack.c.0.s8 %v421
    %v423 = vperm.slane %v417, %v422
    %v425 = vunpack.c.l.s4 1983009808
    %v426 = vunpack.c.0.s8 %v425
    %v427 = vperm.slane %v419, %v426
    %v428 = vrot.slane %v283, 4
    %v429 = vsel %vm176, %v428, %v279
    %v430 = vrot.slane %v279, 4
    %v431 = vsel %vm176, %v283, %v430
    %v433 = vunpack.c.l.s4 1983009808
    %v434 = vunpack.c.0.s8 %v433
    %v435 = vperm.slane %v429, %v434
    %v437 = vunpack.c.l.s4 1983009808
    %v438 = vunpack.c.0.s8 %v437
    %v439 = vperm.slane %v431, %v438
    %v440 = vrot.slane %v411, 4
    %v441 = vsel %vm176, %v440, %v399
    %v442 = vrot.slane %v399, 4
    %v443 = vsel %vm176, %v411, %v442
    %v445 = vunpack.c.l.s4 1934713408
    %v446 = vunpack.c.0.s8 %v445
    %v447 = vperm.slane %v441, %v446
    %v449 = vunpack.c.l.s4 1934713408
    %v450 = vunpack.c.0.s8 %v449
    %v451 = vperm.slane %v443, %v450
    %v452 = vrot.slane %v415, 4
    %v453 = vsel %vm176, %v452, %v403
    %v455 = vunpack.c.l.s4 1934713408
    %v456 = vunpack.c.0.s8 %v455
    %v457 = vperm.slane %v453, %v456
    %v458 = vrot.slane %v435, 4
    %v459 = vsel %vm176, %v458, %v423
    %v460 = vrot.slane %v423, 4
    %v461 = vsel %vm176, %v435, %v460
    %v463 = vunpack.c.l.s4 1934713408
    %v464 = vunpack.c.0.s8 %v463
    %v465 = vperm.slane %v459, %v464
    %v467 = vunpack.c.l.s4 1934713408
    %v468 = vunpack.c.0.s8 %v467
    %v469 = vperm.slane %v461, %v468
    %v470 = vrot.slane %v439, 4
    %v471 = vsel %vm176, %v470, %v427
    %v473 = vunpack.c.l.s4 1934713408
    %v474 = vunpack.c.0.s8 %v473
    %v475 = vperm.slane %v471, %v474
    %v476 = vrot.slane %v465, 4
    %v477 = vsel %vm176, %v476, %v447
    %v478 = vrot.slane %v447, 4
    %v479 = vsel %vm176, %v465, %v478
    %v480 = vrot.slane %v469, 4
    %v481 = vsel %vm176, %v480, %v451
    %v482 = vrot.slane %v451, 4
    %v483 = vsel %vm176, %v469, %v482
    %v484 = vrot.slane %v475, 4
    %v485 = vsel %vm176, %v484, %v457
    %v486 = vrot.slane %v457, 4
    %v487 = vsel %vm176, %v475, %v486
    %v488 = vrot.slane %v381, 4
    %v489 = vsel %vm176, %v488, %v377
    %v490 = vrot.slane %v377, 4
    %v491 = vsel %vm176, %v381, %v490
    %v493 = vunpack.c.l.s4 1983009808
    %v494 = vunpack.c.0.s8 %v493
    %v495 = vperm.slane %v489, %v494
    %v497 = vunpack.c.l.s4 1983009808
    %v498 = vunpack.c.0.s8 %v497
    %v499 = vperm.slane %v491, %v498
    %v500 = vrot.slane %v383, 4
    %v501 = vsel %vm176, %v500, %v379
    %v502 = vrot.slane %v379, 4
    %v503 = vsel %vm176, %v383, %v502
    %v505 = vunpack.c.l.s4 1983009808
    %v506 = vunpack.c.0.s8 %v505
    %v507 = vperm.slane %v501, %v506
    %v509 = vunpack.c.l.s4 1983009808
    %v510 = vunpack.c.0.s8 %v509
    %v511 = vperm.slane %v503, %v510
    %v512 = vrot.slane %v389, 4
    %v513 = vsel %vm176, %v512, %v385
    %v514 = vrot.slane %v385, 4
    %v515 = vsel %vm176, %v389, %v514
    %v517 = vunpack.c.l.s4 1983009808
    %v518 = vunpack.c.0.s8 %v517
    %v519 = vperm.slane %v513, %v518
    %v521 = vunpack.c.l.s4 1983009808
    %v522 = vunpack.c.0.s8 %v521
    %v523 = vperm.slane %v515, %v522
    %v524 = vrot.slane %v391, 4
    %v525 = vsel %vm176, %v524, %v387
    %v526 = vrot.slane %v387, 4
    %v527 = vsel %vm176, %v391, %v526
    %v529 = vunpack.c.l.s4 1983009808
    %v530 = vunpack.c.0.s8 %v529
    %v531 = vperm.slane %v525, %v530
    %v533 = vunpack.c.l.s4 1983009808
    %v534 = vunpack.c.0.s8 %v533
    %v535 = vperm.slane %v527, %v534
    %v536 = vrot.slane %v507, 4
    %v537 = vsel %vm176, %v536, %v495
    %v538 = vrot.slane %v495, 4
    %v539 = vsel %vm176, %v507, %v538
    %v541 = vunpack.c.l.s4 1934713408
    %v542 = vunpack.c.0.s8 %v541
    %v543 = vperm.slane %v537, %v542
    %v545 = vunpack.c.l.s4 1934713408
    %v546 = vunpack.c.0.s8 %v545
    %v547 = vperm.slane %v539, %v546
    %v548 = vrot.slane %v511, 4
    %v549 = vsel %vm176, %v548, %v499
    %v551 = vunpack.c.l.s4 1934713408
    %v552 = vunpack.c.0.s8 %v551
    %v553 = vperm.slane %v549, %v552
    %v554 = vrot.slane %v531, 4
    %v555 = vsel %vm176, %v554, %v519
    %v556 = vrot.slane %v519, 4
    %v557 = vsel %vm176, %v531, %v556
    %v559 = vunpack.c.l.s4 1934713408
    %v560 = vunpack.c.0.s8 %v559
    %v561 = vperm.slane %v555, %v560
    %v563 = vunpack.c.l.s4 1934713408
    %v564 = vunpack.c.0.s8 %v563
    %v565 = vperm.slane %v557, %v564
    %v566 = vrot.slane %v535, 4
    %v567 = vsel %vm176, %v566, %v523
    %v569 = vunpack.c.l.s4 1934713408
    %v570 = vunpack.c.0.s8 %v569
    %v571 = vperm.slane %v567, %v570
    %v572 = vrot.slane %v561, 4
    %v573 = vsel %vm176, %v572, %v543
    %v574 = vrot.slane %v543, 4
    %v575 = vsel %vm176, %v561, %v574
    %v576 = vrot.slane %v565, 4
    %v577 = vsel %vm176, %v576, %v547
    %v578 = vrot.slane %v547, 4
    %v579 = vsel %vm176, %v565, %v578
    %v580 = vrot.slane %v571, 4
    %v581 = vsel %vm176, %v580, %v553
    %v582 = vrot.slane %v553, 4
    %v583 = vsel %vm176, %v571, %v582
    %v584 = vpack.c.bf16 %v477, %v477
    %v585 = vpack.c.bf16 %v479, %v479
    %v586 = vpack.c.bf16 %v573, %v573
    %v587 = vpack.c.bf16 %v575, %v575
    %v588 = vpack.c.bf16 %v481, %v481
    %v589 = vpack.c.bf16 %v483, %v483
    %v590 = vpack.c.bf16 %v577, %v577
    %v591 = vpack.c.bf16 %v579, %v579
    %vm592 = vcmask 130048
    %v594 = vsel %vm592, %v584, 0
    %v597 = vsel %vm592, %v588, 0
    %599 = vmatpush.bf16.xpose.msra.mxu0 0
    %600 = vmatpush.bf16.xpose.msra.mxu0 0
    %601 = vmatpush.bf16.xpose.msra.mxu0 0
    %602 = vmatpush.bf16.xpose.msra.mxu0 0
    %603 = vmatpush.bf16.xpose.msra.mxu0 0
    %604 = vmatpush.bf16.xpose.msra.mxu0 0
    %605 = vmatpush.bf16.xpose.msra.mxu0 0
    %606 = vmatpush.bf16.xpose.msra.mxu0 %v597
    %607 = vmatmul.bf16.gmra.mxu0 %v594
    %v608 = vpop.f32.mrf.mxu0
    %v609 = vadd.f32 0.0, %v608
    %v610 = vpop.f32.mrf.mxu0
    %611 = vdwg.mxu0
    %v613 = vsel %vm592, %v585, 0
    %v616 = vsel %vm592, %v589, 0
    %618 = vmatpush.bf16.xpose.msra.mxu0 0
    %619 = vmatpush.bf16.xpose.msra.mxu0 0
    %620 = vmatpush.bf16.xpose.msra.mxu0 0
    %621 = vmatpush.bf16.xpose.msra.mxu0 0
    %622 = vmatpush.bf16.xpose.msra.mxu0 0
    %623 = vmatpush.bf16.xpose.msra.mxu0 0
    %624 = vmatpush.bf16.xpose.msra.mxu0 0
    %625 = vmatpush.bf16.xpose.msra.mxu0 %v616
    %626 = vmatmul.bf16.gmra.mxu0 %v613
    %v627 = vpop.f32.mrf.mxu0
    %v628 = vadd.f32 0.0, %v627
    %v629 = vpop.f32.mrf.mxu0
    %630 = vdwg.mxu0
    %v632 = vsel %vm592, %v586, 0
    %v635 = vsel %vm592, %v590, 0
    %637 = vmatpush.bf16.xpose.msra.mxu0 0
    %638 = vmatpush.bf16.xpose.msra.mxu0 0
    %639 = vmatpush.bf16.xpose.msra.mxu0 0
    %640 = vmatpush.bf16.xpose.msra.mxu0 0
    %641 = vmatpush.bf16.xpose.msra.mxu0 0
    %642 = vmatpush.bf16.xpose.msra.mxu0 0
    %643 = vmatpush.bf16.xpose.msra.mxu0 0
    %644 = vmatpush.bf16.xpose.msra.mxu0 %v635
    %645 = vmatmul.bf16.gmra.mxu0 %v632
    %v646 = vpop.f32.mrf.mxu0
    %v647 = vadd.f32 0.0, %v646
    %v648 = vpop.f32.mrf.mxu0
    %649 = vdwg.mxu0
    %v651 = vsel %vm592, %v587, 0
    %v654 = vsel %vm592, %v591, 0
    %656 = vmatpush.bf16.xpose.msra.mxu0 0
    %657 = vmatpush.bf16.xpose.msra.mxu0 0
    %658 = vmatpush.bf16.xpose.msra.mxu0 0
    %659 = vmatpush.bf16.xpose.msra.mxu0 0
    %660 = vmatpush.bf16.xpose.msra.mxu0 0
    %661 = vmatpush.bf16.xpose.msra.mxu0 0
    %662 = vmatpush.bf16.xpose.msra.mxu0 0
    %663 = vmatpush.bf16.xpose.msra.mxu0 %v654
    %664 = vmatmul.bf16.gmra.mxu0 %v651
    %v665 = vpop.f32.mrf.mxu0
    %v666 = vadd.f32 0.0, %v665
    %v667 = vpop.f32.mrf.mxu0
    %668 = vdwg.mxu0
    %vm669 = vcmask 64512
    %v670 = vsel %vm669, %v609, -inf
    %671 = vmax.xlane.f32.xlu0 %v670
    %v672 = vpop.xlane.xlu0 %671
    %v673 = vsel %vm669, %v628, -inf
    %674 = vmax.xlane.f32.xlu0 %v673
    %v675 = vpop.xlane.xlu0 %674
    %v676 = vsel %vm669, %v647, -inf
    %677 = vmax.xlane.f32.xlu0 %v676
    %v678 = vpop.xlane.xlu0 %677
    %v679 = vsel %vm669, %v666, -inf
    %680 = vmax.xlane.f32.xlu0 %v679
    %v681 = vpop.xlane.xlu0 %680
    %v682 = vsub.f32 %v609, %v672
    %v683 = vsub.f32 %v628, %v675
    %v684 = vsub.f32 %v647, %v678
    %v685 = vsub.f32 %v666, %v681
    %v686 = vmul.f32 %v682, 1.442695
    %v687 = vpow.pop %v686
    %v688 = vmul.f32 %v683, 1.442695
    %v689 = vpow.pop %v688
    %v690 = vmul.f32 %v684, 1.442695
    %v691 = vpow.pop %v690
    %v692 = vmul.f32 %v685, 1.442695
    %v693 = vpow.pop %v692
    %v694 = vsel %vm669, %v687, 0.0
    %695 = vadd.xlane.f32.xlu0 %v694
    %v696 = vpop.xlane.xlu0 %695
    %v697 = vsel %vm669, %v689, 0.0
    %698 = vadd.xlane.f32.xlu0 %v697
    %v699 = vpop.xlane.xlu0 %698
    %v700 = vsel %vm669, %v691, 0.0
    %701 = vadd.xlane.f32.xlu0 %v700
    %v702 = vpop.xlane.xlu0 %701
    %v703 = vsel %vm669, %v693, 0.0
    %704 = vadd.xlane.f32.xlu0 %v703
    %v705 = vpop.xlane.xlu0 %704
    %v706 = vpack.c.bf16 %v687, %v687
    %v707 = vpack.c.bf16 %v689, %v689
    %v708 = vpack.c.bf16 %v691, %v691
    %v709 = vpack.c.bf16 %v693, %v693
    %v710 = vpack.c.bf16 %v485, %v485
    %v711 = vpack.c.bf16 %v487, %v487
    %v712 = vpack.c.bf16 %v581, %v581
    %v713 = vpack.c.bf16 %v583, %v583
    %v715 = vsel %vm669, %v706, 0
    %vm717 = vcmask 1043456
    %v719 = vsel %vm717, %v710, 0
    %721 = vmatpush.bf16.msra.mxu0 0
    %722 = vmatpush.bf16.msra.mxu0 0
    %723 = vmatpush.bf16.msra.mxu0 0
    %724 = vmatpush.bf16.msra.mxu0 0
    %725 = vmatpush.bf16.msra.mxu0 0
    %726 = vmatpush.bf16.msra.mxu0 0
    %727 = vmatpush.bf16.msra.mxu0 0
    %728 = vmatpush.bf16.msra.mxu0 %v719
    %729 = vmatmul.bf16.gmra.mxu0 %v715
    %v730 = vpop.f32.mrf.mxu0
    %v731 = vadd.f32 0.0, %v730
    %v732 = vpop.f32.mrf.mxu0
    %733 = vdwg.mxu0
    %v735 = vsel %vm669, %v707, 0
    %v738 = vsel %vm717, %v711, 0
    %740 = vmatpush.bf16.msra.mxu0 0
    %741 = vmatpush.bf16.msra.mxu0 0
    %742 = vmatpush.bf16.msra.mxu0 0
    %743 = vmatpush.bf16.msra.mxu0 0
    %744 = vmatpush.bf16.msra.mxu0 0
    %745 = vmatpush.bf16.msra.mxu0 0
    %746 = vmatpush.bf16.msra.mxu0 0
    %747 = vmatpush.bf16.msra.mxu0 %v738
    %748 = vmatmul.bf16.gmra.mxu0 %v735
    %v749 = vpop.f32.mrf.mxu0
    %v750 = vadd.f32 0.0, %v749
    %v751 = vpop.f32.mrf.mxu0
    %752 = vdwg.mxu0
    %v754 = vsel %vm669, %v708, 0
    %v757 = vsel %vm717, %v712, 0
    %759 = vmatpush.bf16.msra.mxu0 0
    %760 = vmatpush.bf16.msra.mxu0 0
    %761 = vmatpush.bf16.msra.mxu0 0
    %762 = vmatpush.bf16.msra.mxu0 0
    %763 = vmatpush.bf16.msra.mxu0 0
    %764 = vmatpush.bf16.msra.mxu0 0
    %765 = vmatpush.bf16.msra.mxu0 0
    %766 = vmatpush.bf16.msra.mxu0 %v757
    %767 = vmatmul.bf16.gmra.mxu0 %v754
    %v768 = vpop.f32.mrf.mxu0
    %v769 = vadd.f32 0.0, %v768
    %v770 = vpop.f32.mrf.mxu0
    %771 = vdwg.mxu0
    %v773 = vsel %vm669, %v709, 0
    %v776 = vsel %vm717, %v713, 0
    %778 = vmatpush.bf16.msra.mxu0 0
    %779 = vmatpush.bf16.msra.mxu0 0
    %780 = vmatpush.bf16.msra.mxu0 0
    %781 = vmatpush.bf16.msra.mxu0 0
    %782 = vmatpush.bf16.msra.mxu0 0
    %783 = vmatpush.bf16.msra.mxu0 0
    %784 = vmatpush.bf16.msra.mxu0 0
    %785 = vmatpush.bf16.msra.mxu0 %v776
    %786 = vmatmul.bf16.gmra.mxu0 %v773
    %v787 = vpop.f32.mrf.mxu0
    %v788 = vadd.f32 0.0, %v787
    %v789 = vpop.f32.mrf.mxu0
    %790 = vdwg.mxu0
    %v791 = vrcp.pop %v696
    %v792 = vrcp.pop %v699
    %v793 = vrcp.pop %v702
    %v794 = vrcp.pop %v705
    %v795 = vmul.f32 %v731, %v791
    %v796 = vmul.f32 %v750, %v792
    %v797 = vmul.f32 %v769, %v793
    %v798 = vmul.f32 %v788, %v794
    %v799 = vrot.slane %v795, 4
    %v800 = vsel %vm176, 0.0, %v799
    %v802 = vunpack.c.l.s4 1983009808
    %v803 = vunpack.c.0.s8 %v802
    %v804 = vperm.slane %v795, %v803
    %v806 = vunpack.c.l.s4 1983009808
    %v807 = vunpack.c.0.s8 %v806
    %v808 = vperm.slane %v800, %v807
    %v809 = vrot.slane %v796, 4
    %v810 = vsel %vm176, 0.0, %v809
    %v812 = vunpack.c.l.s4 1983009808
    %v813 = vunpack.c.0.s8 %v812
    %v814 = vperm.slane %v796, %v813
    %v816 = vunpack.c.l.s4 1983009808
    %v817 = vunpack.c.0.s8 %v816
    %v818 = vperm.slane %v810, %v817
    %v819 = vrot.slane %v814, 4
    %v820 = vsel %vm176, %v819, %v804
    %v821 = vrot.slane %v804, 4
    %v822 = vsel %vm176, %v814, %v821
    %v824 = vunpack.c.l.s4 1934713408
    %v825 = vunpack.c.0.s8 %v824
    %v826 = vperm.slane %v820, %v825
    %v828 = vunpack.c.l.s4 1934713408
    %v829 = vunpack.c.0.s8 %v828
    %v830 = vperm.slane %v822, %v829
    %v831 = vrot.slane %v818, 4
    %v832 = vsel %vm176, %v831, %v808
    %v833 = vrot.slane %v808, 4
    %v834 = vsel %vm176, %v818, %v833
    %v836 = vunpack.c.l.s4 1934713408
    %v837 = vunpack.c.0.s8 %v836
    %v838 = vperm.slane %v832, %v837
    %v840 = vunpack.c.l.s4 1934713408
    %v841 = vunpack.c.0.s8 %v840
    %v842 = vperm.slane %v834, %v841
    %v843 = vrot.slane %v826, 4
    %v844 = vsel %vm176, 0.0, %v843
    %v845 = vrot.slane %v830, 4
    %v846 = vsel %vm176, 0.0, %v845
    %v847 = vrot.slane %v838, 4
    %v848 = vsel %vm176, 0.0, %v847
    %v849 = vrot.slane %v842, 4
    %v850 = vsel %vm176, 0.0, %v849
    %v851 = vrot.slane %v797, 4
    %v852 = vsel %vm176, 0.0, %v851
    %v854 = vunpack.c.l.s4 1983009808
    %v855 = vunpack.c.0.s8 %v854
    %v856 = vperm.slane %v797, %v855
    %v858 = vunpack.c.l.s4 1983009808
    %v859 = vunpack.c.0.s8 %v858
    %v860 = vperm.slane %v852, %v859
    %v861 = vrot.slane %v798, 4
    %v862 = vsel %vm176, 0.0, %v861
    %v864 = vunpack.c.l.s4 1983009808
    %v865 = vunpack.c.0.s8 %v864
    %v866 = vperm.slane %v798, %v865
    %v868 = vunpack.c.l.s4 1983009808
    %v869 = vunpack.c.0.s8 %v868
    %v870 = vperm.slane %v862, %v869
    %v871 = vrot.slane %v866, 4
    %v872 = vsel %vm176, %v871, %v856
    %v873 = vrot.slane %v856, 4
    %v874 = vsel %vm176, %v866, %v873
    %v876 = vunpack.c.l.s4 1934713408
    %v877 = vunpack.c.0.s8 %v876
    %v878 = vperm.slane %v872, %v877
    %v880 = vunpack.c.l.s4 1934713408
    %v881 = vunpack.c.0.s8 %v880
    %v882 = vperm.slane %v874, %v881
    %v883 = vrot.slane %v870, 4
    %v884 = vsel %vm176, %v883, %v860
    %v885 = vrot.slane %v860, 4
    %v886 = vsel %vm176, %v870, %v885
    %v888 = vunpack.c.l.s4 1934713408
    %v889 = vunpack.c.0.s8 %v888
    %v890 = vperm.slane %v884, %v889
    %v892 = vunpack.c.l.s4 1934713408
    %v893 = vunpack.c.0.s8 %v892
    %v894 = vperm.slane %v886, %v893
    %v895 = vrot.slane %v878, 4
    %v896 = vsel %vm176, 0.0, %v895
    %v897 = vrot.slane %v882, 4
    %v898 = vsel %vm176, 0.0, %v897
    %v899 = vrot.slane %v890, 4
    %v900 = vsel %vm176, 0.0, %v899
    %v901 = vrot.slane %v894, 4
    %v902 = vsel %vm176, 0.0, %v901
    %v903 = vsel %vm176, %v845, %v826
    %v905 = vunpack.c.l.s4 1983009808
    %v906 = vunpack.c.0.s8 %v905
    %v907 = vperm.slane %v903, %v906
    %v908 = vrot.slane %v846, 4
    %v909 = vsel %vm176, %v908, %v844
    %v911 = vunpack.c.l.s4 1983009808
    %v912 = vunpack.c.0.s8 %v911
    %v913 = vperm.slane %v909, %v912
    %v914 = vsel %vm176, %v849, %v838
    %v916 = vunpack.c.l.s4 1983009808
    %v917 = vunpack.c.0.s8 %v916
    %v918 = vperm.slane %v914, %v917
    %v919 = vrot.slane %v850, 4
    %v920 = vsel %vm176, %v919, %v848
    %v922 = vunpack.c.l.s4 1983009808
    %v923 = vunpack.c.0.s8 %v922
    %v924 = vperm.slane %v920, %v923
    %v925 = vrot.slane %v913, 4
    %v926 = vsel %vm176, %v925, %v907
    %v928 = vunpack.c.l.s4 1934713408
    %v929 = vunpack.c.0.s8 %v928
    %v930 = vperm.slane %v926, %v929
    %v931 = vrot.slane %v924, 4
    %v932 = vsel %vm176, %v931, %v918
    %v934 = vunpack.c.l.s4 1934713408
    %v935 = vunpack.c.0.s8 %v934
    %v936 = vperm.slane %v932, %v935
    %v937 = vrot.slane %v936, 4
    %v938 = vsel %vm176, %v937, %v930
    %v939 = vrot.slane %v930, 4
    %v940 = vsel %vm176, %v936, %v939
    %v941 = vsel %vm176, %v897, %v878
    %v943 = vunpack.c.l.s4 1983009808
    %v944 = vunpack.c.0.s8 %v943
    %v945 = vperm.slane %v941, %v944
    %v946 = vrot.slane %v898, 4
    %v947 = vsel %vm176, %v946, %v896
    %v949 = vunpack.c.l.s4 1983009808
    %v950 = vunpack.c.0.s8 %v949
    %v951 = vperm.slane %v947, %v950
    %v952 = vsel %vm176, %v901, %v890
    %v954 = vunpack.c.l.s4 1983009808
    %v955 = vunpack.c.0.s8 %v954
    %v956 = vperm.slane %v952, %v955
    %v957 = vrot.slane %v902, 4
    %v958 = vsel %vm176, %v957, %v900
    %v960 = vunpack.c.l.s4 1983009808
    %v961 = vunpack.c.0.s8 %v960
    %v962 = vperm.slane %v958, %v961
    %v963 = vrot.slane %v951, 4
    %v964 = vsel %vm176, %v963, %v945
    %v966 = vunpack.c.l.s4 1934713408
    %v967 = vunpack.c.0.s8 %v966
    %v968 = vperm.slane %v964, %v967
    %v969 = vrot.slane %v962, 4
    %v970 = vsel %vm176, %v969, %v956
    %v972 = vunpack.c.l.s4 1934713408
    %v973 = vunpack.c.0.s8 %v972
    %v974 = vperm.slane %v970, %v973
    %v975 = vrot.slane %v974, 4
    %v976 = vsel %vm176, %v975, %v968
    %v977 = vrot.slane %v968, 4
    %v978 = vsel %vm176, %v974, %v977
    %981 = vrot.lane.b32.xlu0 %v940, 16
    %v982 = vpop.permute.xlu0 %981
    %983 = vrot.lane.b32.xlu0 %v978, 16
    %v984 = vpop.permute.xlu0 %983
    %v987 = vsel %vm592, %v938, %v982
    %v988 = vsel %vm592, %v976, %v984
    %v989 = vpack.c.bf16 %v988, %v987
    %v990 = vld [vmem:[%s4] sm:$0xf]
    %v991 = vld [vmem:[%s4 + $0x4] sm:$0xf]
    %v992 = vld [vmem:[%s4 + $0x8] sm:$0xf]
    %v993 = vld [vmem:[%s4 + $0xc] sm:$0xf]
    %v994 = vld [vmem:[%s5] sm:$0x1]
    %v996 = vperm.slane %v994, 0
    %v1002 = vunpack.c.l.b16 %v990
    %v1003 = vunpack.c.l.b16 %v991
    %v1004 = vunpack.c.l.b16 %v992
    %v1005 = vunpack.c.l.b16 %v993
    %v1006 = vpack.c.b16 %v1003, %v1002
    %v1007 = vpack.c.b16 %v1005, %v1004
    %v1011 = vsel %vm47, %v989, 0
    %1013 = vmatpush.bf16.msra.mxu0 0
    %1014 = vmatpush.bf16.msra.mxu0 0
    %1015 = vmatpush.bf16.msra.mxu0 0
    %1016 = vmatpush.bf16.msra.mxu0 0
    %1017 = vmatpush.bf16.msra.mxu0 0
    %1018 = vmatpush.bf16.msra.mxu0 0
    %1019 = vmatpush.bf16.msra.mxu0 %v1007
    %1020 = vmatpush.bf16.msra.mxu0 %v1006
    %1021 = vmatmul.bf16.gmra.mxu0 %v1011
    %v1022 = vpop.f32.mrf.mxu0
    %v1023 = vadd.f32 %v996, %v1022
    %v1024 = vpop.f32.mrf.mxu0
    %v1025 = vadd.f32 %v996, %v1024
    %1026 = vdwg.mxu0
    %v1027 = vadd.f32 %v1023, %v43
    %v1028 = vadd.f32 %v1025, %v44
    %v1029 = vld [vmem:[%s6] sm:$0x1]
    %v1030 = vld [vmem:[%s7] sm:$0x1]
    %v1031 = vsel %vm47, %v1027, 0.0
    %1032 = vadd.xlane.f32.xlu0 %v1031
    %v1033 = vpop.xlane.xlu0 %1032
    %v1034 = vsel %vm47, %v1028, 0.0
    %1035 = vadd.xlane.f32.xlu0 %v1034
    %v1036 = vpop.xlane.xlu0 %1035
    %v1037 = vmul.f32 %v1033, %v60
    %v1038 = vmul.f32 %v1036, %v60
    %v1039 = vsub.f32 %v1027, %v1037
    %v1040 = vsub.f32 %v1028, %v1038
    %v1041 = vmul.f32 %v1039, %v1039
    %v1042 = vmul.f32 %v1040, %v1040
    %v1043 = vsel %vm47, %v1041, 0.0
    %1044 = vadd.xlane.f32.xlu0 %v1043
    %v1045 = vpop.xlane.xlu0 %1044
    %v1046 = vsel %vm47, %v1042, 0.0
    %1047 = vadd.xlane.f32.xlu0 %v1046
    %v1048 = vpop.xlane.xlu0 %1047
    %v1049 = vmul.f32 %v1045, %v60
    %v1050 = vmul.f32 %v1048, %v60
    %v1051 = vadd.f32 %v1049, 1e-05
    %v1052 = vadd.f32 %v1050, 1e-05
    %v1053 = vrsqrt.pop %v1051
    %v1054 = vmul.f32 %v1053, %v1051
    %v1055 = vmul.f32 %v1054, %v1053
    %v1056 = vmul.f32 0.5, %v1055
    %v1057 = vsub.f32 1.5, %v1056
    %v1058 = vmul.f32 %v1053, %v1057
    %vm1059 = vweird.f32 %v1051
    %vm1060 = vweird.f32 %v1053
    %vm1061 = vmor %vm1059, %vm1060
    %v1062 = vsel %vm1061, %v1053, %v1058
    %v1063 = vrsqrt.pop %v1052
    %v1064 = vmul.f32 %v1063, %v1052
    %v1065 = vmul.f32 %v1064, %v1063
    %v1066 = vmul.f32 0.5, %v1065
    %v1067 = vsub.f32 1.5, %v1066
    %v1068 = vmul.f32 %v1063, %v1067
    %vm1069 = vweird.f32 %v1052
    %vm1070 = vweird.f32 %v1063
    %vm1071 = vmor %vm1069, %vm1070
    %v1072 = vsel %vm1071, %v1063, %v1068
    %v1073 = vmul.f32 %v1039, %v1062
    %v1074 = vmul.f32 %v1040, %v1072
    %v1076 = vperm.slane %v1029, 0
    %v1078 = vmul.f32 %v1073, %v1076
    %v1079 = vmul.f32 %v1074, %v1076
    %v1081 = vperm.slane %v1030, 0
    %v1083 = vadd.f32 %v1078, %v1081
    %v1084 = vadd.f32 %v1079, %v1081
    %v1085 = vpack.c.bf16 %v1084, %v1083
    %v1086 = vld [vmem:[%s8] sm:$0xf]
    %v1087 = vld [vmem:[%s8 + $0x4] sm:$0xf]
    %v1088 = vld [vmem:[%s8 + $0x8] sm:$0xf]
    %v1089 = vld [vmem:[%s8 + $0xc] sm:$0xf]
    %v1090 = vld [vmem:[%s9] sm:$0x1]
    %v1092 = vperm.slane %v1090, 0
    %v1098 = vunpack.c.l.b16 %v1086
    %v1099 = vunpack.c.l.b16 %v1087
    %v1100 = vunpack.c.l.b16 %v1088
    %v1101 = vunpack.c.l.b16 %v1089
    %v1102 = vpack.c.b16 %v1099, %v1098
    %v1103 = vpack.c.b16 %v1101, %v1100
    %v1107 = vsel %vm47, %v1085, 0
    %1109 = vmatpush.bf16.msra.mxu0 0
    %1110 = vmatpush.bf16.msra.mxu0 0
    %1111 = vmatpush.bf16.msra.mxu0 0
    %1112 = vmatpush.bf16.msra.mxu0 0
    %1113 = vmatpush.bf16.msra.mxu0 0
    %1114 = vmatpush.bf16.msra.mxu0 0
    %1115 = vmatpush.bf16.msra.mxu0 %v1103
    %1116 = vmatpush.bf16.msra.mxu0 %v1102
    %1117 = vmatmul.bf16.gmra.mxu0 %v1107
    %v1118 = vpop.f32.mrf.mxu0
    %v1119 = vadd.f32 %v1092, %v1118
    %v1120 = vpop.f32.mrf.mxu0
    %v1121 = vadd.f32 %v1092, %v1120
    %1122 = vdwg.mxu0
    %v1123 = vmul.f32 %v1119, 0.5
    %v1124 = vmul.f32 %v1121, 0.5
    %v1125 = vmul.f32 %v1119, 0.70710677
    %v1126 = vmul.f32 %v1121, 0.70710677
    %v1127 = vmul.f32 %v1125, %v1125
    %v1128 = vmin.f32 16.0, %v1127
    %v1129 = vmul.f32 %v1128, 2.1237322e-06
    %v1130 = vadd.f32 %v1129, 0.00028619796
    %v1131 = vmul.f32 %v1128, %v1130
    %v1132 = vadd.f32 %v1131, 0.0036580483
    %v1133 = vmul.f32 %v1128, %v1132
    %v1134 = vadd.f32 %v1133, 0.05243302
    %v1135 = vmul.f32 %v1128, %v1134
    %v1136 = vadd.f32 %v1135, 0.18741608
    %v1137 = vmul.f32 %v1128, %v1136
    %v1138 = vadd.f32 %v1137, 1.1283791
    %v1139 = vmul.f32 %v1125, %v1138
    %v1140 = vmul.f32 %v1128, 3.8918573e-05
    %v1141 = vadd.f32 %v1140, 0.001143296
    %v1142 = vmul.f32 %v1128, %v1141
    %v1143 = vadd.f32 %v1142, 0.014752088
    %v1144 = vmul.f32 %v1128, %v1143
    %v1145 = vadd.f32 %v1144, 0.112945676
    %v1146 = vmul.f32 %v1128, %v1145
    %v1147 = vadd.f32 %v1146, 0.4994258
    %v1148 = vmul.f32 %v1128, %v1147
    %v1149 = vadd.f32 %v1148, 1.0
    %v1150 = vrcp.pop %v1149
    %v1151 = vmul.f32 %v1149, %v1150
    %v1152 = vsub.f32 1.0, %v1151
    %v1153 = vmul.f32 %v1150, %v1152
    %v1154 = vadd.f32 %v1150, %v1153
    %vm1155 = vweird.f32 %v1149
    %vm1156 = vweird.f32 %v1150
    %vm1157 = vmor %vm1155, %vm1156
    %v1158 = vsel %vm1157, %v1150, %v1154
    %v1159 = vand.u32 2147483647, %v1149
    %vm1160 = vcmp.eq.f32.partialorder %v1159, 8.507059e+37
    %v1161 = vand.u32 %v1149, 2147483648
    %v1162 = vor.u32 1.1754944e-38, %v1161
    %v1163 = vsel %vm1160, %v1162, %v1158
    %v1164 = vmul.f32 %v1139, %v1163
    %v1165 = vmin.f32 %v1164, 1.0
    %v1166 = vmax.f32 %v1165, -1.0
    %v1167 = vmul.f32 %v1126, %v1126
    %v1168 = vmin.f32 16.0, %v1167
    %v1169 = vmul.f32 %v1168, 2.1237322e-06
    %v1170 = vadd.f32 %v1169, 0.00028619796
    %v1171 = vmul.f32 %v1168, %v1170
    %v1172 = vadd.f32 %v1171, 0.0036580483
    %v1173 = vmul.f32 %v1168, %v1172
    %v1174 = vadd.f32 %v1173, 0.05243302
    %v1175 = vmul.f32 %v1168, %v1174
    %v1176 = vadd.f32 %v1175, 0.18741608
    %v1177 = vmul.f32 %v1168, %v1176
    %v1178 = vadd.f32 %v1177, 1.1283791
    %v1179 = vmul.f32 %v1126, %v1178
    %v1180 = vmul.f32 %v1168, 3.8918573e-05
    %v1181 = vadd.f32 %v1180, 0.001143296
    %v1182 = vmul.f32 %v1168, %v1181
    %v1183 = vadd.f32 %v1182, 0.014752088
    %v1184 = vmul.f32 %v1168, %v1183
    %v1185 = vadd.f32 %v1184, 0.112945676
    %v1186 = vmul.f32 %v1168, %v1185
    %v1187 = vadd.f32 %v1186, 0.4994258
    %v1188 = vmul.f32 %v1168, %v1187
    %v1189 = vadd.f32 %v1188, 1.0
    %v1190 = vrcp.pop %v1189
    %v1191 = vmul.f32 %v1189, %v1190
    %v1192 = vsub.f32 1.0, %v1191
    %v1193 = vmul.f32 %v1190, %v1192
    %v1194 = vadd.f32 %v1190, %v1193
    %vm1195 = vweird.f32 %v1189
    %vm1196 = vweird.f32 %v1190
    %vm1197 = vmor %vm1195, %vm1196
    %v1198 = vsel %vm1197, %v1190, %v1194
    %v1199 = vand.u32 2147483647, %v1189
    %vm1200 = vcmp.eq.f32.partialorder %v1199, 8.507059e+37
    %v1201 = vand.u32 %v1189, 2147483648
    %v1202 = vor.u32 1.1754944e-38, %v1201
    %v1203 = vsel %vm1200, %v1202, %v1198
    %v1204 = vmul.f32 %v1179, %v1203
    %v1205 = vmin.f32 %v1204, 1.0
    %v1206 = vmax.f32 %v1205, -1.0
    %v1207 = vadd.f32 %v1166, 1.0
    %v1208 = vadd.f32 %v1206, 1.0
    %v1209 = vmul.f32 %v1123, %v1207
    %v1210 = vmul.f32 %v1124, %v1208
    %v1211 = vpack.c.bf16 %v1210, %v1209
    %v1212 = vld [vmem:[%s10] sm:$0xf]
    %v1213 = vld [vmem:[%s10 + $0x4] sm:$0xf]
    %v1214 = vld [vmem:[%s10 + $0x8] sm:$0xf]
    %v1215 = vld [vmem:[%s10 + $0xc] sm:$0xf]
    %v1216 = vld [vmem:[%s10 + $0x10] sm:$0xf]
    %v1217 = vld [vmem:[%s10 + $0x14] sm:$0xf]
    %v1218 = vld [vmem:[%s10 + $0x18] sm:$0xf]
    %v1219 = vld [vmem:[%s10 + $0x1c] sm:$0xf]
    %v1220 = vld [vmem:[%s10 + $0x20] sm:$0xf]
    %v1221 = vld [vmem:[%s10 + $0x24] sm:$0xf]
    %v1222 = vld [vmem:[%s10 + $0x28] sm:$0xf]
    %v1223 = vld [vmem:[%s10 + $0x2c] sm:$0xf]
    %v1224 = vld [vmem:[%s10 + $0x30] sm:$0xf]
    %v1225 = vld [vmem:[%s10 + $0x34] sm:$0xf]
    %v1226 = vld [vmem:[%s10 + $0x38] sm:$0xf]
    %v1227 = vld [vmem:[%s10 + $0x3c] sm:$0xf]
    %v1228 = vld [vmem:[%s11] sm:$0x1]
    %v1230 = vperm.slane %v1228, 0
    %v1248 = vunpack.c.l.b16 %v1212
    %v1249 = vunpack.c.l.b16 %v1213
    %v1250 = vunpack.c.l.b16 %v1214
    %v1251 = vunpack.c.l.b16 %v1215
    %v1252 = vunpack.c.l.b16 %v1216
    %v1253 = vunpack.c.l.b16 %v1217
    %v1254 = vunpack.c.l.b16 %v1218
    %v1255 = vunpack.c.l.b16 %v1219
    %v1256 = vunpack.c.l.b16 %v1220
    %v1257 = vunpack.c.l.b16 %v1221
    %v1258 = vunpack.c.l.b16 %v1222
    %v1259 = vunpack.c.l.b16 %v1223
    %v1260 = vunpack.c.l.b16 %v1224
    %v1261 = vunpack.c.l.b16 %v1225
    %v1262 = vunpack.c.l.b16 %v1226
    %v1263 = vunpack.c.l.b16 %v1227
    %v1264 = vpack.c.b16 %v1249, %v1248
    %v1265 = vpack.c.b16 %v1251, %v1250
    %v1266 = vpack.c.b16 %v1253, %v1252
    %v1267 = vpack.c.b16 %v1255, %v1254
    %v1268 = vpack.c.b16 %v1257, %v1256
    %v1269 = vpack.c.b16 %v1259, %v1258
    %v1270 = vpack.c.b16 %v1261, %v1260
    %v1271 = vpack.c.b16 %v1263, %v1262
    %1280 = vmatpush.bf16.msra.mxu0 %v1271
    %1281 = vmatpush.bf16.msra.mxu0 %v1270
    %1282 = vmatpush.bf16.msra.mxu0 %v1269
    %1283 = vmatpush.bf16.msra.mxu0 %v1268
    %1284 = vmatpush.bf16.msra.mxu0 %v1267
    %1285 = vmatpush.bf16.msra.mxu0 %v1266
    %1286 = vmatpush.bf16.msra.mxu0 %v1265
    %1287 = vmatpush.bf16.msra.mxu0 %v1264
    %1288 = vmatmul.bf16.gmra.mxu0 %v1211
    %v1289 = vpop.f32.mrf.mxu0
    %v1290 = vadd.f32 %v1230, %v1289
    %v1291 = vpop.f32.mrf.mxu0
    %v1292 = vadd.f32 %v1230, %v1291
    %1293 = vdwg.mxu0
    %v1294 = vadd.f32 %v1290, %v1027
    %v1295 = vadd.f32 %v1292, %v1028
    %1296 = vst.msk [vmem:[#allocation2] sm:$0xff] %vm47, %v1294
    %1297 = vst.msk [vmem:[#allocation2 + $0x8] sm:$0xff] %vm47, %v1295
    // Predicated region
    $region50: #{tpu_custom_call.1} parent=1 // pred_check
      _
    $region51: #{tpu_custom_call.1} parent=1 // pred_check_branch
      %1299 = sbr.rel (0) target = $region53
    $region52: #{tpu_custom_call.1} parent=1 // pred_region
      %1301 = vsyncadd [#allocation3], 0
      %s1302 = sshll.u32 [#allocation2], 4
      %s1303 = int_to_ptr.vmem [resolvable:$true] %s1302
      %s1304 = sshll.u32 %s12, 4
      %s1305 = int_to_ptr.hbm [resolvable:$true] %s1304
      %1310 = dma.vmem_to_hbm [thread:$0]  %s1303, 256, %s1305, [#allocation3], 128, 128, 8
    $region53: #{tpu_custom_call.1} parent=1 // pred_fallthru
      _
    // Predicated region
    $region54: #{tpu_custom_call.1} parent=1 // pred_check
      _
    $region55: #{tpu_custom_call.1} parent=1 // pred_check_branch
      %1312 = sbr.rel (0) target = $region57
    $region56: #{tpu_custom_call.1} parent=1 // pred_region
      %1314 = dma.done [#allocation3], 256
    $region57: #{tpu_custom_call.1} parent=1 // pred_fallthru
      _
    %1315 = vsyncpa [#allocation3], 1

// kernel: tpu_custom_call.1
$region0: #{tpu_custom_call.1}
  #allocation0 [shape = 'u32[]', space=smem, size = 0x4, offset = 0x4, fixed_abs, tag = 'smem constant byte address 0x4 - core index']
  #allocation1 [shape = 'u32[72,128]{1,0:T(1,128)}', space=vmem, size = 0x9000, scoped, tag = 'internal scratch']
  %s0 = inlined_call_operand.vmem [shape: f32[2,8,32], index: 0, kind: input, shape index: {}]
  %s1 = inlined_call_operand.vmem [shape: f32[1,32], index: 1, kind: input, shape index: {}]
  %s2 = inlined_call_operand.vmem [shape: f32[1,32], index: 2, kind: input, shape index: {}]
  %s3 = inlined_call_operand.vmem [shape: bf16[32,96], index: 3, kind: input, shape index: {}]
  %s4 = inlined_call_operand.vmem [shape: bf16[32,32], index: 4, kind: input, shape index: {}]
  %s5 = inlined_call_operand.vmem [shape: f32[1,32], index: 5, kind: input, shape index: {}]
  %s6 = inlined_call_operand.vmem [shape: f32[1,32], index: 6, kind: input, shape index: {}]
  %s7 = inlined_call_operand.vmem [shape: f32[1,32], index: 7, kind: input, shape index: {}]
  %s8 = inlined_call_operand.vmem [shape: bf16[32,128], index: 8, kind: input, shape index: {}]
  %s9 = inlined_call_operand.vmem [shape: f32[1,128], index: 9, kind: input, shape index: {}]
  %s10 = inlined_call_operand.vmem [shape: bf16[128,32], index: 10, kind: input, shape index: {}]
  %s11 = inlined_call_operand.vmem [shape: f32[1,32], index: 11, kind: input, shape index: {}]
  %s12 = inlined_call_operand.hbm [shape: f32[2,8,32], index: 12, kind: output, shape index: {}]
  %s13 = sld [smem:[#allocation0]]
  $region58: #{tpu_custom_call.1} parent=0
    _
  %s15 = ssub.s32 1, %s13
  %s16 = scalar_select 0, %s15, %s13
  $region1: #{tpu_custom_call.1} parent=0
    #allocation2 [shape = 'u8[8192]{0}', space=vmem, size = 0x2000, scoped, tag = 'output window, operand 0, single buffered']
    #allocation3 [shape = 's32[1]{0}', space=sflag, size = 0x4, scoped, tag = 'scoped memory for tpu_custom_call.1']
    %17 = vsyncpa [#allocation3], 0
    // Predicated region
    $region2: #{tpu_custom_call.1} parent=1 // pred_check
      _
    $region3: #{tpu_custom_call.1} parent=1 // pred_check_branch
      %19 = sbr.rel (0) target = $region5
    $region4: #{tpu_custom_call.1} parent=1 // pred_region
      _
    $region5: #{tpu_custom_call.1} parent=1 // pred_fallthru
      _
    // Predicated region
    $region6: #{tpu_custom_call.1} parent=1 // pred_check
      _
    $region7: #{tpu_custom_call.1} parent=1 // pred_check_branch
      %21 = sbr.rel (0) target = $region9
    $region8: #{tpu_custom_call.1} parent=1 // pred_region
      _
    $region9: #{tpu_custom_call.1} parent=1 // pred_fallthru
      _
    // Predicated region
    $region10: #{tpu_custom_call.1} parent=1 // pred_check
      _
    $region11: #{tpu_custom_call.1} parent=1 // pred_check_branch
      %23 = sbr.rel (0) target = $region13
    $region12: #{tpu_custom_call.1} parent=1 // pred_region
      _
    $region13: #{tpu_custom_call.1} parent=1 // pred_fallthru
      _
    // Predicated region
    $region14: #{tpu_custom_call.1} parent=1 // pred_check
      _
    $region15: #{tpu_custom_call.1} parent=1 // pred_check_branch
      %25 = sbr.rel (0) target = $region17
    $region16: #{tpu_custom_call.1} parent=1 // pred_region
      _
    $region17: #{tpu_custom_call.1} parent=1 // pred_fallthru
      _
    // Predicated region
    $region18: #{tpu_custom_call.1} parent=1 // pred_check
      _
    $region19: #{tpu_custom_call.1} parent=1 // pred_check_branch
      %27 = sbr.rel (0) target = $region21
    $region20: #{tpu_custom_call.1} parent=1 // pred_region
      _
    $region21: #{tpu_custom_call.1} parent=1 // pred_fallthru
      _
    // Predicated region
    $region22: #{tpu_custom_call.1} parent=1 // pred_check
      _
    $region23: #{tpu_custom_call.1} parent=1 // pred_check_branch
      %29 = sbr.rel (0) target = $region25
    $region24: #{tpu_custom_call.1} parent=1 // pred_region
      _
    $region25: #{tpu_custom_call.1} parent=1 // pred_fallthru
      _
    // Predicated region
    $region26: #{tpu_custom_call.1} parent=1 // pred_check
      _
    $region27: #{tpu_custom_call.1} parent=1 // pred_check_branch
      %31 = sbr.rel (0) target = $region29
    $region28: #{tpu_custom_call.1} parent=1 // pred_region
      _
    $region29: #{tpu_custom_call.1} parent=1 // pred_fallthru
      _
    // Predicated region
    $region30: #{tpu_custom_call.1} parent=1 // pred_check
      _
    $region31: #{tpu_custom_call.1} parent=1 // pred_check_branch
      %33 = sbr.rel (0) target = $region33
    $region32: #{tpu_custom_call.1} parent=1 // pred_region
      _
    $region33: #{tpu_custom_call.1} parent=1 // pred_fallthru
      _
    // Predicated region
    $region34: #{tpu_custom_call.1} parent=1 // pred_check
      _
    $region35: #{tpu_custom_call.1} parent=1 // pred_check_branch
      %35 = sbr.rel (0) target = $region37
    $region36: #{tpu_custom_call.1} parent=1 // pred_region
      _
    $region37: #{tpu_custom_call.1} parent=1 // pred_fallthru
      _
    // Predicated region
    $region38: #{tpu_custom_call.1} parent=1 // pred_check
      _
    $region39: #{tpu_custom_call.1} parent=1 // pred_check_branch
      %37 = sbr.rel (0) target = $region41
    $region40: #{tpu_custom_call.1} parent=1 // pred_region
      _
    $region41: #{tpu_custom_call.1} parent=1 // pred_fallthru
      _
    // Predicated region
    $region42: #{tpu_custom_call.1} parent=1 // pred_check
      _
    $region43: #{tpu_custom_call.1} parent=1 // pred_check_branch
      %39 = sbr.rel (0) target = $region45
    $region44: #{tpu_custom_call.1} parent=1 // pred_region
      _
    $region45: #{tpu_custom_call.1} parent=1 // pred_fallthru
      _
    // Predicated region
    $region46: #{tpu_custom_call.1} parent=1 // pred_check
      _
    $region47: #{tpu_custom_call.1} parent=1 // pred_check_branch
      %41 = sbr.rel (0) target = $region49
    $region48: #{tpu_custom_call.1} parent=1 // pred_region
      _
    $region49: #{tpu_custom_call.1} parent=1 // pred_fallthru
      _
    %v43 = vld [vmem:[%s0] sm:$0xff]
    %v44 = vld [vmem:[%s0 + $0x8] sm:$0xff]
    %v45 = vld [vmem:[%s1] sm:$0x1]
    %v46 = vld [vmem:[%s2] sm:$0x1]
    %vm47 = vcmask 261120
    %v48 = vsel %vm47, %v43, 0.0
    %49 = vadd.xlane.f32.xlu0 %v48
    %v50 = vpop.xlane.xlu0 %49
    %v51 = vsel %vm47, %v44, 0.0
    %52 = vadd.xlane.f32.xlu0 %v51
    %v53 = vpop.xlane.xlu0 %52
    %v54 = vrcp.pop 32.0
    %v55 = vmul.f32 32.0, %v54
    %v56 = vsub.f32 1.0, %v55
    %v57 = vmul.f32 %v54, %v56
    %v58 = vadd.f32 %v54, %v57
    %vm59 = vweird.f32 %v54
    %v60 = vsel %vm59, %v54, %v58
    %v61 = vmul.f32 %v50, %v60
    %v62 = vmul.f32 %v53, %v60
    %v63 = vsub.f32 %v43, %v61
    %v64 = vsub.f32 %v44, %v62
    %v65 = vmul.f32 %v63, %v63
    %v66 = vmul.f32 %v64, %v64
    %v67 = vsel %vm47, %v65, 0.0
    %68 = vadd.xlane.f32.xlu0 %v67
    %v69 = vpop.xlane.xlu0 %68
    %v70 = vsel %vm47, %v66, 0.0
    %71 = vadd.xlane.f32.xlu0 %v70
    %v72 = vpop.xlane.xlu0 %71
    %v73 = vmul.f32 %v69, %v60
    %v74 = vmul.f32 %v72, %v60
    %v75 = vadd.f32 %v73, 1e-05
    %v76 = vadd.f32 %v74, 1e-05
    %v77 = vrsqrt.pop %v75
    %v78 = vmul.f32 %v77, %v75
    %v79 = vmul.f32 %v78, %v77
    %v80 = vmul.f32 0.5, %v79
    %v81 = vsub.f32 1.5, %v80
    %v82 = vmul.f32 %v77, %v81
    %vm83 = vweird.f32 %v75
    %vm84 = vweird.f32 %v77
    %vm85 = vmor %vm83, %vm84
    %v86 = vsel %vm85, %v77, %v82
    %v87 = vrsqrt.pop %v76
    %v88 = vmul.f32 %v87, %v76
    %v89 = vmul.f32 %v88, %v87
    %v90 = vmul.f32 0.5, %v89
    %v91 = vsub.f32 1.5, %v90
    %v92 = vmul.f32 %v87, %v91
    %vm93 = vweird.f32 %v76
    %vm94 = vweird.f32 %v87
    %vm95 = vmor %vm93, %vm94
    %v96 = vsel %vm95, %v87, %v92
    %v97 = vmul.f32 %v63, %v86
    %v98 = vmul.f32 %v64, %v96
    %v100 = vperm.slane %v45, 0
    %v102 = vmul.f32 %v97, %v100
    %v103 = vmul.f32 %v98, %v100
    %v105 = vperm.slane %v46, 0
    %v107 = vadd.f32 %v102, %v105
    %v108 = vadd.f32 %v103, %v105
    %v109 = vpack.c.bf16 %v108, %v107
    %v110 = vld [vmem:[%s3] sm:$0xf]
    %v111 = vld [vmem:[%s3 + $0x4] sm:$0xf]
    %v112 = vld [vmem:[%s3 + $0x8] sm:$0xf]
    %v113 = vld [vmem:[%s3 + $0xc] sm:$0xf]
    %v118 = vunpack.c.l.b16 %v110
    %v119 = vunpack.c.l.b16 %v111
    %v120 = vunpack.c.l.b16 %v112
    %v121 = vunpack.c.l.b16 %v113
    %v122 = vpack.c.b16 %v119, %v118
    %v123 = vpack.c.b16 %v121, %v120
    %v127 = vsel %vm47, %v109, 0
    %129 = vmatpush.bf16.msra.mxu0 0
    %130 = vmatpush.bf16.msra.mxu0 0
    %131 = vmatpush.bf16.msra.mxu0 0
    %132 = vmatpush.bf16.msra.mxu0 0
    %133 = vmatpush.bf16.msra.mxu0 0
    %134 = vmatpush.bf16.msra.mxu0 0
    %135 = vmatpush.bf16.msra.mxu0 %v123
    %136 = vmatpush.bf16.msra.mxu0 %v122
    %137 = vmatmul.bf16.gmra.mxu0 %v127
    %v138 = vpop.f32.mrf.mxu0
    %v139 = vadd.f32 0.0, %v138
    %v140 = vpop.f32.mrf.mxu0
    %v141 = vadd.f32 0.0, %v140
    %142 = vdwg.mxu0
    %145 = vrot.lane.b32.xlu0 %v139, 112
    %v146 = vpop.permute.xlu0 %145
    %147 = vrot.lane.b32.xlu0 %v141, 112
    %v148 = vpop.permute.xlu0 %147
    %151 = vrot.lane.b32.xlu0 %v139, 96
    %v152 = vpop.permute.xlu0 %151
    %153 = vrot.lane.b32.xlu0 %v141, 96
    %v154 = vpop.permute.xlu0 %153
    %157 = vrot.lane.b32.xlu0 %v139, 80
    %v158 = vpop.permute.xlu0 %157
    %159 = vrot.lane.b32.xlu0 %v141, 80
    %v160 = vpop.permute.xlu0 %159
    %163 = vrot.lane.b32.xlu0 %v139, 64
    %v164 = vpop.permute.xlu0 %163
    %165 = vrot.lane.b32.xlu0 %v141, 64
    %v166 = vpop.permute.xlu0 %165
    %169 = vrot.lane.b32.xlu0 %v139, 48
    %v170 = vpop.permute.xlu0 %169
    %171 = vrot.lane.b32.xlu0 %v141, 48
    %v172 = vpop.permute.xlu0 %171
    %v175 = vrot.slane %v152, 4
    %vm176 = vcmask 1047556
    %v177 = vsel %vm176, %v175, %v139
    %v178 = vrot.slane %v139, 4
    %v179 = vsel %vm176, %v152, %v178
    %v181 = vunpack.c.l.s4 1983009808
    %v182 = vunpack.c.0.s8 %v181
    %v183 = vperm.slane %v177, %v182
    %v185 = vunpack.c.l.s4 1983009808
    %v186 = vunpack.c.0.s8 %v185
    %v187 = vperm.slane %v179, %v186
    %v188 = vrot.slane %v158, 4
    %v189 = vsel %vm176, %v188, %v146
    %v190 = vrot.slane %v146, 4
    %v191 = vsel %vm176, %v158, %v190
    %v193 = vunpack.c.l.s4 1983009808
    %v194 = vunpack.c.0.s8 %v193
    %v195 = vperm.slane %v189, %v194
    %v197 = vunpack.c.l.s4 1983009808
    %v198 = vunpack.c.0.s8 %v197
    %v199 = vperm.slane %v191, %v198
    %v200 = vrot.slane %v164, 4
    %v201 = vsel %vm176, 0.0, %v200
    %v203 = vunpack.c.l.s4 1983009808
    %v204 = vunpack.c.0.s8 %v203
    %v205 = vperm.slane %v164, %v204
    %v207 = vunpack.c.l.s4 1983009808
    %v208 = vunpack.c.0.s8 %v207
    %v209 = vperm.slane %v201, %v208
    %v210 = vrot.slane %v170, 4
    %v211 = vsel %vm176, 0.0, %v210
    %v213 = vunpack.c.l.s4 1983009808
    %v214 = vunpack.c.0.s8 %v213
    %v215 = vperm.slane %v170, %v214
    %v217 = vunpack.c.l.s4 1983009808
    %v218 = vunpack.c.0.s8 %v217
    %v219 = vperm.slane %v211, %v218
    %v220 = vrot.slane %v195, 4
    %v221 = vsel %vm176, %v220, %v183
    %v222 = vrot.slane %v183, 4
    %v223 = vsel %vm176, %v195, %v222
    %v225 = vunpack.c.l.s4 1934713408
    %v226 = vunpack.c.0.s8 %v225
    %v227 = vperm.slane %v221, %v226
    %v229 = vunpack.c.l.s4 1934713408
    %v230 = vunpack.c.0.s8 %v229
    %v231 = vperm.slane %v223, %v230
    %v232 = vrot.slane %v199, 4
    %v233 = vsel %vm176, %v232, %v187
    %v234 = vrot.slane %v187, 4
    %v235 = vsel %vm176, %v199, %v234
    %v237 = vunpack.c.l.s4 1934713408
    %v238 = vunpack.c.0.s8 %v237
    %v239 = vperm.slane %v233, %v238
    %v241 = vunpack.c.l.s4 1934713408
    %v242 = vunpack.c.0.s8 %v241
    %v243 = vperm.slane %v235, %v242
    %v244 = vrot.slane %v215, 4
    %v245 = vsel %vm176, %v244, %v205
    %v246 = vrot.slane %v205, 4
    %v247 = vsel %vm176, %v215, %v246
    %v249 = vunpack.c.l.s4 1934713408
    %v250 = vunpack.c.0.s8 %v249
    %v251 = vperm.slane %v245, %v250
    %v253 = vunpack.c.l.s4 1934713408
    %v254 = vunpack.c.0.s8 %v253
    %v255 = vperm.slane %v247, %v254
    %v256 = vrot.slane %v219, 4
    %v257 = vsel %vm176, %v256, %v209
    %v258 = vrot.slane %v209, 4
    %v259 = vsel %vm176, %v219, %v258
    %v261 = vunpack.c.l.s4 1934713408
    %v262 = vunpack.c.0.s8 %v261
    %v263 = vperm.slane %v257, %v262
    %v265 = vunpack.c.l.s4 1934713408
    %v266 = vunpack.c.0.s8 %v265
    %v267 = vperm.slane %v259, %v266
    %v268 = vrot.slane %v251, 4
    %v269 = vsel %vm176, %v268, %v227
    %v270 = vrot.slane %v227, 4
    %v271 = vsel %vm176, %v251, %v270
    %v272 = vrot.slane %v255, 4
    %v273 = vsel %vm176, %v272, %v231
    %v274 = vrot.slane %v231, 4
    %v275 = vsel %vm176, %v255, %v274
    %v276 = vrot.slane %v263, 4
    %v277 = vsel %vm176, %v276, %v239
    %v278 = vrot.slane %v239, 4
    %v279 = vsel %vm176, %v263, %v278
    %v280 = vrot.slane %v267, 4
    %v281 = vsel %vm176, %v280, %v243
    %v282 = vrot.slane %v243, 4
    %v283 = vsel %vm176, %v267, %v282
    %v284 = vrot.slane %v154, 4
    %v285 = vsel %vm176, %v284, %v141
    %v286 = vrot.slane %v141, 4
    %v287 = vsel %vm176, %v154, %v286
    %v289 = vunpack.c.l.s4 1983009808
    %v290 = vunpack.c.0.s8 %v289
    %v291 = vperm.slane %v285, %v290
    %v293 = vunpack.c.l.s4 1983009808
    %v294 = vunpack.c.0.s8 %v293
    %v295 = vperm.slane %v287, %v294
    %v296 = vrot.slane %v160, 4
    %v297 = vsel %vm176, %v296, %v148
    %v298 = vrot.slane %v148, 4
    %v299 = vsel %vm176, %v160, %v298
    %v301 = vunpack.c.l.s4 1983009808
    %v302 = vunpack.c.0.s8 %v301
    %v303 = vperm.slane %v297, %v302
    %v305 = vunpack.c.l.s4 1983009808
    %v306 = vunpack.c.0.s8 %v305
    %v307 = vperm.slane %v299, %v306
    %v308 = vrot.slane %v166, 4
    %v309 = vsel %vm176, 0.0, %v308
    %v311 = vunpack.c.l.s4 1983009808
    %v312 = vunpack.c.0.s8 %v311
    %v313 = vperm.slane %v166, %v312
    %v315 = vunpack.c.l.s4 1983009808
    %v316 = vunpack.c.0.s8 %v315
    %v317 = vperm.slane %v309, %v316
    %v318 = vrot.slane %v172, 4
    %v319 = vsel %vm176, 0.0, %v318
    %v321 = vunpack.c.l.s4 1983009808
    %v322 = vunpack.c.0.s8 %v321
    %v323 = vperm.slane %v172, %v322
    %v325 = vunpack.c.l.s4 1983009808
    %v326 = vunpack.c.0.s8 %v325
    %v327 = vperm.slane %v319, %v326
    %v328 = vrot.slane %v303, 4
    %v329 = vsel %vm176, %v328, %v291
    %v330 = vrot.slane %v291, 4
    %v331 = vsel %vm176, %v303, %v330
    %v333 = vunpack.c.l.s4 1934713408
    %v334 = vunpack.c.0.s8 %v333
    %v335 = vperm.slane %v329, %v334
    %v337 = vunpack.c.l.s4 1934713408
    %v338 = vunpack.c.0.s8 %v337
    %v339 = vperm.slane %v331, %v338
    %v340 = vrot.slane %v307, 4
    %v341 = vsel %vm176, %v340, %v295
    %v342 = vrot.slane %v295, 4
    %v343 = vsel %vm176, %v307, %v342
    %v345 = vunpack.c.l.s4 1934713408
    %v346 = vunpack.c.0.s8 %v345
    %v347 = vperm.slane %v341, %v346
    %v349 = vunpack.c.l.s4 1934713408
    %v350 = vunpack.c.0.s8 %v349
    %v351 = vperm.slane %v343, %v350
    %v352 = vrot.slane %v323, 4
    %v353 = vsel %vm176, %v352, %v313
    %v354 = vrot.slane %v313, 4
    %v355 = vsel %vm176, %v323, %v354
    %v357 = vunpack.c.l.s4 1934713408
    %v358 = vunpack.c.0.s8 %v357
    %v359 = vperm.slane %v353, %v358
    %v361 = vunpack.c.l.s4 1934713408
    %v362 = vunpack.c.0.s8 %v361
    %v363 = vperm.slane %v355, %v362
    %v364 = vrot.slane %v327, 4
    %v365 = vsel %vm176, %v364, %v317
    %v366 = vrot.slane %v317, 4
    %v367 = vsel %vm176, %v327, %v366
    %v369 = vunpack.c.l.s4 1934713408
    %v370 = vunpack.c.0.s8 %v369
    %v371 = vperm.slane %v365, %v370
    %v373 = vunpack.c.l.s4 1934713408
    %v374 = vunpack.c.0.s8 %v373
    %v375 = vperm.slane %v367, %v374
    %v376 = vrot.slane %v359, 4
    %v377 = vsel %vm176, %v376, %v335
    %v378 = vrot.slane %v335, 4
    %v379 = vsel %vm176, %v359, %v378
    %v380 = vrot.slane %v363, 4
    %v381 = vsel %vm176, %v380, %v339
    %v382 = vrot.slane %v339, 4
    %v383 = vsel %vm176, %v363, %v382
    %v384 = vrot.slane %v371, 4
    %v385 = vsel %vm176, %v384, %v347
    %v386 = vrot.slane %v347, 4
    %v387 = vsel %vm176, %v371, %v386
    %v388 = vrot.slane %v375, 4
    %v389 = vsel %vm176, %v388, %v351
    %v390 = vrot.slane %v351, 4
    %v391 = vsel %vm176, %v375, %v390
    %v392 = vrot.slane %v273, 4
    %v393 = vsel %vm176, %v392, %v269
    %v394 = vrot.slane %v269, 4
    %v395 = vsel %vm176, %v273, %v394
    %v397 = vunpack.c.l.s4 1983009808
    %v398 = vunpack.c.0.s8 %v397
    %v399 = vperm.slane %v393, %v398
    %v401 = vunpack.c.l.s4 1983009808
    %v402 = vunpack.c.0.s8 %v401
    %v403 = vperm.slane %v395, %v402
    %v404 = vrot.slane %v275, 4
    %v405 = vsel %vm176, %v404, %v271
    %v406 = vrot.slane %v271, 4
    %v407 = vsel %vm176, %v275, %v406
    %v409 = vunpack.c.l.s4 1983009808
    %v410 = vunpack.c.0.s8 %v409
    %v411 = vperm.slane %v405, %v410
    %v413 = vunpack.c.l.s4 1983009808
    %v414 = vunpack.c.0.s8 %v413
    %v415 = vperm.slane %v407, %v414
    %v416 = vrot.slane %v281, 4
    %v417 = vsel %vm176, %v416, %v277
    %v418 = vrot.slane %v277, 4
    %v419 = vsel %vm176, %v281, %v418
    %v421 = vunpack.c.l.s4 1983009808
    %v422 = vunpack.c.0.s8 %v421
    %v423 = vperm.slane %v417, %v422
    %v425 = vunpack.c.l.s4 1983009808
    %v426 = vunpack.c.0.s8 %v425
    %v427 = vperm.slane %v419, %v426
    %v428 = vrot.slane %v283, 4
    %v429 = vsel %vm176, %v428, %v279
    %v430 = vrot.slane %v279, 4
    %v431 = vsel %vm176, %v283, %v430
    %v433 = vunpack.c.l.s4 1983009808
    %v434 = vunpack.c.0.s8 %v433
    %v435 = vperm.slane %v429, %v434
    %v437 = vunpack.c.l.s4 1983009808
    %v438 = vunpack.c.0.s8 %v437
    %v439 = vperm.slane %v431, %v438
    %v440 = vrot.slane %v411, 4
    %v441 = vsel %vm176, %v440, %v399
    %v442 = vrot.slane %v399, 4
    %v443 = vsel %vm176, %v411, %v442
    %v445 = vunpack.c.l.s4 1934713408
    %v446 = vunpack.c.0.s8 %v445
    %v447 = vperm.slane %v441, %v446
    %v449 = vunpack.c.l.s4 1934713408
    %v450 = vunpack.c.0.s8 %v449
    %v451 = vperm.slane %v443, %v450
    %v452 = vrot.slane %v415, 4
    %v453 = vsel %vm176, %v452, %v403
    %v455 = vunpack.c.l.s4 1934713408
    %v456 = vunpack.c.0.s8 %v455
    %v457 = vperm.slane %v453, %v456
    %v458 = vrot.slane %v435, 4
    %v459 = vsel %vm176, %v458, %v423
    %v460 = vrot.slane %v423, 4
    %v461 = vsel %vm176, %v435, %v460
    %v463 = vunpack.c.l.s4 1934713408
    %v464 = vunpack.c.0.s8 %v463
    %v465 = vperm.slane %v459, %v464
    %v467 = vunpack.c.l.s4 1934713408
    %v468 = vunpack.c.0.s8 %v467
    %v469 = vperm.slane %v461, %v468
    %v470 = vrot.slane %v439, 4
    %v471 = vsel %vm176, %v470, %v427
    %v473 = vunpack.c.l.s4 1934713408
    %v474 = vunpack.c.0.s8 %v473
    %v475 = vperm.slane %v471, %v474
    %v476 = vrot.slane %v465, 4
    %v477 = vsel %vm176, %v476, %v447
    %v478 = vrot.slane %v447, 4
    %v479 = vsel %vm176, %v465, %v478
    %v480 = vrot.slane %v469, 4
    %v481 = vsel %vm176, %v480, %v451
    %v482 = vrot.slane %v451, 4
    %v483 = vsel %vm176, %v469, %v482
    %v484 = vrot.slane %v475, 4
    %v485 = vsel %vm176, %v484, %v457
    %v486 = vrot.slane %v457, 4
    %v487 = vsel %vm176, %v475, %v486
    %v488 = vrot.slane %v381, 4
    %v489 = vsel %vm176, %v488, %v377
    %v490 = vrot.slane %v377, 4
    %v491 = vsel %vm176, %v381, %v490
    %v493 = vunpack.c.l.s4 1983009808
    %v494 = vunpack.c.0.s8 %v493
    %v495 = vperm.slane %v489, %v494
    %v497 = vunpack.c.l.s4 1983009808
    %v498 = vunpack.c.0.s8 %v497
    %v499 = vperm.slane %v491, %v498
    %v500 = vrot.slane %v383, 4
    %v501 = vsel %vm176, %v500, %v379
    %v502 = vrot.slane %v379, 4
    %v503 = vsel %vm176, %v383, %v502
    %v505 = vunpack.c.l.s4 1983009808
    %v506 = vunpack.c.0.s8 %v505
    %v507 = vperm.slane %v501, %v506
    %v509 = vunpack.c.l.s4 1983009808
    %v510 = vunpack.c.0.s8 %v509
    %v511 = vperm.slane %v503, %v510
    %v512 = vrot.slane %v389, 4
    %v513 = vsel %vm176, %v512, %v385
    %v514 = vrot.slane %v385, 4
    %v515 = vsel %vm176, %v389, %v514
    %v517 = vunpack.c.l.s4 1983009808
    %v518 = vunpack.c.0.s8 %v517
    %v519 = vperm.slane %v513, %v518
    %v521 = vunpack.c.l.s4 1983009808
    %v522 = vunpack.c.0.s8 %v521
    %v523 = vperm.slane %v515, %v522
    %v524 = vrot.slane %v391, 4
    %v525 = vsel %vm176, %v524, %v387
    %v526 = vrot.slane %v387, 4
    %v527 = vsel %vm176, %v391, %v526
    %v529 = vunpack.c.l.s4 1983009808
    %v530 = vunpack.c.0.s8 %v529
    %v531 = vperm.slane %v525, %v530
    %v533 = vunpack.c.l.s4 1983009808
    %v534 = vunpack.c.0.s8 %v533
    %v535 = vperm.slane %v527, %v534
    %v536 = vrot.slane %v507, 4
    %v537 = vsel %vm176, %v536, %v495
    %v538 = vrot.slane %v495, 4
    %v539 = vsel %vm176, %v507, %v538
    %v541 = vunpack.c.l.s4 1934713408
    %v542 = vunpack.c.0.s8 %v541
    %v543 = vperm.slane %v537, %v542
    %v545 = vunpack.c.l.s4 1934713408
    %v546 = vunpack.c.0.s8 %v545
    %v547 = vperm.slane %v539, %v546
    %v548 = vrot.slane %v511, 4
    %v549 = vsel %vm176, %v548, %v499
    %v551 = vunpack.c.l.s4 1934713408
    %v552 = vunpack.c.0.s8 %v551
    %v553 = vperm.slane %v549, %v552
    %v554 = vrot.slane %v531, 4
    %v555 = vsel %vm176, %v554, %v519
    %v556 = vrot.slane %v519, 4
    %v557 = vsel %vm176, %v531, %v556
    %v559 = vunpack.c.l.s4 1934713408
    %v560 = vunpack.c.0.s8 %v559
    %v561 = vperm.slane %v555, %v560
    %v563 = vunpack.c.l.s4 1934713408
    %v564 = vunpack.c.0.s8 %v563
    %v565 = vperm.slane %v557, %v564
    %v566 = vrot.slane %v535, 4
    %v567 = vsel %vm176, %v566, %v523
    %v569 = vunpack.c.l.s4 1934713408
    %v570 = vunpack.c.0.s8 %v569
    %v571 = vperm.slane %v567, %v570
    %v572 = vrot.slane %v561, 4
    %v573 = vsel %vm176, %v572, %v543
    %v574 = vrot.slane %v543, 4
    %v575 = vsel %vm176, %v561, %v574
    %v576 = vrot.slane %v565, 4
    %v577 = vsel %vm176, %v576, %v547
    %v578 = vrot.slane %v547, 4
    %v579 = vsel %vm176, %v565, %v578
    %v580 = vrot.slane %v571, 4
    %v581 = vsel %vm176, %v580, %v553
    %v582 = vrot.slane %v553, 4
    %v583 = vsel %vm176, %v571, %v582
    %v584 = vpack.c.bf16 %v477, %v477
    %v585 = vpack.c.bf16 %v479, %v479
    %v586 = vpack.c.bf16 %v573, %v573
    %v587 = vpack.c.bf16 %v575, %v575
    %v588 = vpack.c.bf16 %v481, %v481
    %v589 = vpack.c.bf16 %v483, %v483
    %v590 = vpack.c.bf16 %v577, %v577
    %v591 = vpack.c.bf16 %v579, %v579
    %vm592 = vcmask 130048
    %v594 = vsel %vm592, %v584, 0
    %v597 = vsel %vm592, %v588, 0
    %599 = vmatpush.bf16.xpose.msra.mxu0 0
    %600 = vmatpush.bf16.xpose.msra.mxu0 0
    %601 = vmatpush.bf16.xpose.msra.mxu0 0
    %602 = vmatpush.bf16.xpose.msra.mxu0 0
    %603 = vmatpush.bf16.xpose.msra.mxu0 0
    %604 = vmatpush.bf16.xpose.msra.mxu0 0
    %605 = vmatpush.bf16.xpose.msra.mxu0 0
    %606 = vmatpush.bf16.xpose.msra.mxu0 %v597
    %607 = vmatmul.bf16.gmra.mxu0 %v594
    %v608 = vpop.f32.mrf.mxu0
    %v609 = vadd.f32 0.0, %v608
    %v610 = vpop.f32.mrf.mxu0
    %611 = vdwg.mxu0
    %v613 = vsel %vm592, %v585, 0
    %v616 = vsel %vm592, %v589, 0
    %618 = vmatpush.bf16.xpose.msra.mxu0 0
    %619 = vmatpush.bf16.xpose.msra.mxu0 0
    %620 = vmatpush.bf16.xpose.msra.mxu0 0
    %621 = vmatpush.bf16.xpose.msra.mxu0 0
    %622 = vmatpush.bf16.xpose.msra.mxu0 0
    %623 = vmatpush.bf16.xpose.msra.mxu0 0
    %624 = vmatpush.bf16.xpose.msra.mxu0 0
    %625 = vmatpush.bf16.xpose.msra.mxu0 %v616
    %626 = vmatmul.bf16.gmra.mxu0 %v613
    %v627 = vpop.f32.mrf.mxu0
    %v628 = vadd.f32 0.0, %v627
    %v629 = vpop.f32.mrf.mxu0
    %630 = vdwg.mxu0
    %v632 = vsel %vm592, %v586, 0
    %v635 = vsel %vm592, %v590, 0
    %637 = vmatpush.bf16.xpose.msra.mxu0 0
    %638 = vmatpush.bf16.xpose.msra.mxu0 0
    %639 = vmatpush.bf16.xpose.msra.mxu0 0
    %640 = vmatpush.bf16.xpose.msra.mxu0 0
    %641 = vmatpush.bf16.xpose.msra.mxu0 0
    %642 = vmatpush.bf16.xpose.msra.mxu0 0
    %643 = vmatpush.bf16.xpose.msra.mxu0 0
    %644 = vmatpush.bf16.xpose.msra.mxu0 %v635
    %645 = vmatmul.bf16.gmra.mxu0 %v632
    %v646 = vpop.f32.mrf.mxu0
    %v647 = vadd.f32 0.0, %v646
    %v648 = vpop.f32.mrf.mxu0
    %649 = vdwg.mxu0
    %v651 = vsel %vm592, %v587, 0
    %v654 = vsel %vm592, %v591, 0
    %656 = vmatpush.bf16.xpose.msra.mxu0 0
    %657 = vmatpush.bf16.xpose.msra.mxu0 0
    %658 = vmatpush.bf16.xpose.msra.mxu0 0
    %659 = vmatpush.bf16.xpose.msra.mxu0 0
    %660 = vmatpush.bf16.xpose.msra.mxu0 0
    %661 = vmatpush.bf16.xpose.msra.mxu0 0
    %662 = vmatpush.bf16.xpose.msra.mxu0 0
    %663 = vmatpush.bf16.xpose.msra.mxu0 %v654
    %664 = vmatmul.bf16.gmra.mxu0 %v651
    %v665 = vpop.f32.mrf.mxu0
    %v666 = vadd.f32 0.0, %v665
    %v667 = vpop.f32.mrf.mxu0
    %668 = vdwg.mxu0
    %vm669 = vcmask 64512
    %v670 = vsel %vm669, %v609, -inf
    %671 = vmax.xlane.f32.xlu0 %v670
    %v672 = vpop.xlane.xlu0 %671
    %v673 = vsel %vm669, %v628, -inf
    %674 = vmax.xlane.f32.xlu0 %v673
    %v675 = vpop.xlane.xlu0 %674
    %v676 = vsel %vm669, %v647, -inf
    %677 = vmax.xlane.f32.xlu0 %v676
    %v678 = vpop.xlane.xlu0 %677
    %v679 = vsel %vm669, %v666, -inf
    %680 = vmax.xlane.f32.xlu0 %v679
    %v681 = vpop.xlane.xlu0 %680
    %v682 = vsub.f32 %v609, %v672
    %v683 = vsub.f32 %v628, %v675
    %v684 = vsub.f32 %v647, %v678
    %v685 = vsub.f32 %v666, %v681
    %v686 = vmul.f32 %v682, 1.442695
    %v687 = vpow.pop %v686
    %v688 = vmul.f32 %v683, 1.442695
    %v689 = vpow.pop %v688
    %v690 = vmul.f32 %v684, 1.442695
    %v691 = vpow.pop %v690
    %v692 = vmul.f32 %v685, 1.442695
    %v693 = vpow.pop %v692
    %v694 = vsel %vm669, %v687, 0.0
    %695 = vadd.xlane.f32.xlu0 %v694
    %v696 = vpop.xlane.xlu0 %695
    %v697 = vsel %vm669, %v689, 0.0
    %698 = vadd.xlane.f32.xlu0 %v697
    %v699 = vpop.xlane.xlu0 %698
    %v700 = vsel %vm669, %v691, 0.0
    %701 = vadd.xlane.f32.xlu0 %v700
    %v702 = vpop.xlane.xlu0 %701
    %v703 = vsel %vm669, %v693, 0.0
    %704 = vadd.xlane.f32.xlu0 %v703
    %v705 = vpop.xlane.xlu0 %704
    %v706 = vpack.c.bf16 %v687, %v687
    %v707 = vpack.c.bf16 %v689, %v689
    %v708 = vpack.c.bf16 %v691, %v691
    %v709 = vpack.c.bf16 %v693, %v693
    %v710 = vpack.c.bf16 %v485, %v485
    %v711 = vpack.c.bf16 %v487, %v487
    %v712 = vpack.c.bf16 %v581, %v581
    %v713 = vpack.c.bf16 %v583, %v583
    %v715 = vsel %vm669, %v706, 0
    %vm717 = vcmask 1043456
    %v719 = vsel %vm717, %v710, 0
    %721 = vmatpush.bf16.msra.mxu0 0
    %722 = vmatpush.bf16.msra.mxu0 0
    %723 = vmatpush.bf16.msra.mxu0 0
    %724 = vmatpush.bf16.msra.mxu0 0
    %725 = vmatpush.bf16.msra.mxu0 0
    %726 = vmatpush.bf16.msra.mxu0 0
    %727 = vmatpush.bf16.msra.mxu0 0
    %728 = vmatpush.bf16.msra.mxu0 %v719
    %729 = vmatmul.bf16.gmra.mxu0 %v715
    %v730 = vpop.f32.mrf.mxu0
    %v731 = vadd.f32 0.0, %v730
    %v732 = vpop.f32.mrf.mxu0
    %733 = vdwg.mxu0
    %v735 = vsel %vm669, %v707, 0
    %v738 = vsel %vm717, %v711, 0
    %740 = vmatpush.bf16.msra.mxu0 0
    %741 = vmatpush.bf16.msra.mxu0 0
    %742 = vmatpush.bf16.msra.mxu0 0
    %743 = vmatpush.bf16.msra.mxu0 0
    %744 = vmatpush.bf16.msra.mxu0 0
    %745 = vmatpush.bf16.msra.mxu0 0
    %746 = vmatpush.bf16.msra.mxu0 0
    %747 = vmatpush.bf16.msra.mxu0 %v738
    %748 = vmatmul.bf16.gmra.mxu0 %v735
    %v749 = vpop.f32.mrf.mxu0
    %v750 = vadd.f32 0.0, %v749
    %v751 = vpop.f32.mrf.mxu0
    %752 = vdwg.mxu0
    %v754 = vsel %vm669, %v708, 0
    %v757 = vsel %vm717, %v712, 0
    %759 = vmatpush.bf16.msra.mxu0 0
    %760 = vmatpush.bf16.msra.mxu0 0
    %761 = vmatpush.bf16.msra.mxu0 0
    %762 = vmatpush.bf16.msra.mxu0 0
    %763 = vmatpush.bf16.msra.mxu0 0
    %764 = vmatpush.bf16.msra.mxu0 0
    %765 = vmatpush.bf16.msra.mxu0 0
    %766 = vmatpush.bf16.msra.mxu0 %v757
    %767 = vmatmul.bf16.gmra.mxu0 %v754
    %v768 = vpop.f32.mrf.mxu0
    %v769 = vadd.f32 0.0, %v768
    %v770 = vpop.f32.mrf.mxu0
    %771 = vdwg.mxu0
    %v773 = vsel %vm669, %v709, 0
    %v776 = vsel %vm717, %v713, 0
    %778 = vmatpush.bf16.msra.mxu0 0
    %779 = vmatpush.bf16.msra.mxu0 0
    %780 = vmatpush.bf16.msra.mxu0 0
    %781 = vmatpush.bf16.msra.mxu0 0
    %782 = vmatpush.bf16.msra.mxu0 0
    %783 = vmatpush.bf16.msra.mxu0 0
    %784 = vmatpush.bf16.msra.mxu0 0
    %785 = vmatpush.bf16.msra.mxu0 %v776
    %786 = vmatmul.bf16.gmra.mxu0 %v773
    %v787 = vpop.f32.mrf.mxu0
    %v788 = vadd.f32 0.0, %v787
    %v789 = vpop.f32.mrf.mxu0
    %790 = vdwg.mxu0
    %v791 = vrcp.pop %v696
    %v792 = vrcp.pop %v699
    %v793 = vrcp.pop %v702
    %v794 = vrcp.pop %v705
    %v795 = vmul.f32 %v731, %v791
    %v796 = vmul.f32 %v750, %v792
    %v797 = vmul.f32 %v769, %v793
    %v798 = vmul.f32 %v788, %v794
    %v799 = vrot.slane %v795, 4
    %v800 = vsel %vm176, 0.0, %v799
    %v802 = vunpack.c.l.s4 1983009808
    %v803 = vunpack.c.0.s8 %v802
    %v804 = vperm.slane %v795, %v803
    %v806 = vunpack.c.l.s4 1983009808
    %v807 = vunpack.c.0.s8 %v806
    %v808 = vperm.slane %v800, %v807
    %v809 = vrot.slane %v796, 4
    %v810 = vsel %vm176, 0.0, %v809
    %v812 = vunpack.c.l.s4 1983009808
    %v813 = vunpack.c.0.s8 %v812
    %v814 = vperm.slane %v796, %v813
    %v816 = vunpack.c.l.s4 1983009808
    %v817 = vunpack.c.0.s8 %v816
    %v818 = vperm.slane %v810, %v817
    %v819 = vrot.slane %v814, 4
    %v820 = vsel %vm176, %v819, %v804
    %v821 = vrot.slane %v804, 4
    %v822 = vsel %vm176, %v814, %v821
    %v824 = vunpack.c.l.s4 1934713408
    %v825 = vunpack.c.0.s8 %v824
    %v826 = vperm.slane %v820, %v825
    %v828 = vunpack.c.l.s4 1934713408
    %v829 = vunpack.c.0.s8 %v828
    %v830 = vperm.slane %v822, %v829
    %v831 = vrot.slane %v818, 4
    %v832 = vsel %vm176, %v831, %v808
    %v833 = vrot.slane %v808, 4
    %v834 = vsel %vm176, %v818, %v833
    %v836 = vunpack.c.l.s4 1934713408
    %v837 = vunpack.c.0.s8 %v836
    %v838 = vperm.slane %v832, %v837
    %v840 = vunpack.c.l.s4 1934713408
    %v841 = vunpack.c.0.s8 %v840
    %v842 = vperm.slane %v834, %v841
    %v843 = vrot.slane %v826, 4
    %v844 = vsel %vm176, 0.0, %v843
    %v845 = vrot.slane %v830, 4
    %v846 = vsel %vm176, 0.0, %v845
    %v847 = vrot.slane %v838, 4
    %v848 = vsel %vm176, 0.0, %v847
    %v849 = vrot.slane %v842, 4
    %v850 = vsel %vm176, 0.0, %v849
    %v851 = vrot.slane %v797, 4
    %v852 = vsel %vm176, 0.0, %v851
    %v854 = vunpack.c.l.s4 1983009808
    %v855 = vunpack.c.0.s8 %v854
    %v856 = vperm.slane %v797, %v855
    %v858 = vunpack.c.l.s4 1983009808
    %v859 = vunpack.c.0.s8 %v858
    %v860 = vperm.slane %v852, %v859
    %v861 = vrot.slane %v798, 4
    %v862 = vsel %vm176, 0.0, %v861
    %v864 = vunpack.c.l.s4 1983009808
    %v865 = vunpack.c.0.s8 %v864
    %v866 = vperm.slane %v798, %v865
    %v868 = vunpack.c.l.s4 1983009808
    %v869 = vunpack.c.0.s8 %v868
    %v870 = vperm.slane %v862, %v869
    %v871 = vrot.slane %v866, 4
    %v872 = vsel %vm176, %v871, %v856
    %v873 = vrot.slane %v856, 4
    %v874 = vsel %vm176, %v866, %v873
    %v876 = vunpack.c.l.s4 1934713408
    %v877 = vunpack.c.0.s8 %v876
    %v878 = vperm.slane %v872, %v877
    %v880 = vunpack.c.l.s4 1934713408
    %v881 = vunpack.c.0.s8 %v880
    %v882 = vperm.slane %v874, %v881
    %v883 = vrot.slane %v870, 4
    %v884 = vsel %vm176, %v883, %v860
    %v885 = vrot.slane %v860, 4
    %v886 = vsel %vm176, %v870, %v885
    %v888 = vunpack.c.l.s4 1934713408
    %v889 = vunpack.c.0.s8 %v888
    %v890 = vperm.slane %v884, %v889
    %v892 = vunpack.c.l.s4 1934713408
    %v893 = vunpack.c.0.s8 %v892
    %v894 = vperm.slane %v886, %v893
    %v895 = vrot.slane %v878, 4
    %v896 = vsel %vm176, 0.0, %v895
    %v897 = vrot.slane %v882, 4
    %v898 = vsel %vm176, 0.0, %v897
    %v899 = vrot.slane %v890, 4
    %v900 = vsel %vm176, 0.0, %v899
    %v901 = vrot.slane %v894, 4
    %v902 = vsel %vm176, 0.0, %v901
    %v903 = vsel %vm176, %v845, %v826
    %v905 = vunpack.c.l.s4 1983009808
    %v906 = vunpack.c.0.s8 %v905
    %v907 = vperm.slane %v903, %v906
    %v908 = vrot.slane %v846, 4
    %v909 = vsel %vm176, %v908, %v844
    %v911 = vunpack.c.l.s4 1983009808
    %v912 = vunpack.c.0.s8 %v911
    %v913 = vperm.slane %v909, %v912
    %v914 = vsel %vm176, %v849, %v838
    %v916 = vunpack.c.l.s4 1983009808
    %v917 = vunpack.c.0.s8 %v916
    %v918 = vperm.slane %v914, %v917
    %v919 = vrot.slane %v850, 4
    %v920 = vsel %vm176, %v919, %v848
    %v922 = vunpack.c.l.s4 1983009808
    %v923 = vunpack.c.0.s8 %v922
    %v924 = vperm.slane %v920, %v923
    %v925 = vrot.slane %v913, 4
    %v926 = vsel %vm176, %v925, %v907
    %v928 = vunpack.c.l.s4 1934713408
    %v929 = vunpack.c.0.s8 %v928
    %v930 = vperm.slane %v926, %v929
    %v931 = vrot.slane %v924, 4
    %v932 = vsel %vm176, %v931, %v918
    %v934 = vunpack.c.l.s4 1934713408
    %v935 = vunpack.c.0.s8 %v934
    %v936 = vperm.slane %v932, %v935
    %v937 = vrot.slane %v936, 4
    %v938 = vsel %vm176, %v937, %v930
    %v939 = vrot.slane %v930, 4
    %v940 = vsel %vm176, %v936, %v939
    %v941 = vsel %vm176, %v897, %v878
    %v943 = vunpack.c.l.s4 1983009808
    %v944 = vunpack.c.0.s8 %v943
    %v945 = vperm.slane %v941, %v944
    %v946 = vrot.slane %v898, 4
    %v947 = vsel %vm176, %v946, %v896
    %v949 = vunpack.c.l.s4 1983009808
    %v950 = vunpack.c.0.s8 %v949
    %v951 = vperm.slane %v947, %v950
    %v952 = vsel %vm176, %v901, %v890
    %v954 = vunpack.c.l.s4 1983009808
    %v955 = vunpack.c.0.s8 %v954
    %v956 = vperm.slane %v952, %v955
    %v957 = vrot.slane %v902, 4
    %v958 = vsel %vm176, %v957, %v900
    %v960 = vunpack.c.l.s4 1983009808
    %v961 = vunpack.c.0.s8 %v960
    %v962 = vperm.slane %v958, %v961
    %v963 = vrot.slane %v951, 4
    %v964 = vsel %vm176, %v963, %v945
    %v966 = vunpack.c.l.s4 1934713408
    %v967 = vunpack.c.0.s8 %v966
    %v968 = vperm.slane %v964, %v967
    %v969 = vrot.slane %v962, 4
    %v970 = vsel %vm176, %v969, %v956
    %v972 = vunpack.c.l.s4 1934713408
    %v973 = vunpack.c.0.s8 %v972
    %v974 = vperm.slane %v970, %v973
    %v975 = vrot.slane %v974, 4
    %v976 = vsel %vm176, %v975, %v968
    %v977 = vrot.slane %v968, 4
    %v978 = vsel %vm176, %v974, %v977
    %981 = vrot.lane.b32.xlu0 %v940, 16
    %v982 = vpop.permute.xlu0 %981
    %983 = vrot.lane.b32.xlu0 %v978, 16
    %v984 = vpop.permute.xlu0 %983
    %v987 = vsel %vm592, %v938, %v982
    %v988 = vsel %vm592, %v976, %v984
    %v989 = vpack.c.bf16 %v988, %v987
    %v990 = vld [vmem:[%s4] sm:$0xf]
    %v991 = vld [vmem:[%s4 + $0x4] sm:$0xf]
    %v992 = vld [vmem:[%s4 + $0x8] sm:$0xf]
    %v993 = vld [vmem:[%s4 + $0xc] sm:$0xf]
    %v994 = vld [vmem:[%s5] sm:$0x1]
    %v996 = vperm.slane %v994, 0
    %v1002 = vunpack.c.l.b16 %v990
    %v1003 = vunpack.c.l.b16 %v991
    %v1004 = vunpack.c.l.b16 %v992
    %v1005 = vunpack.c.l.b16 %v993
    %v1006 = vpack.c.b16 %v1003, %v1002
    %v1007 = vpack.c.b16 %v1005, %v1004
    %v1011 = vsel %vm47, %v989, 0
    %1013 = vmatpush.bf16.msra.mxu0 0
    %1014 = vmatpush.bf16.msra.mxu0 0
    %1015 = vmatpush.bf16.msra.mxu0 0
    %1016 = vmatpush.bf16.msra.mxu0 0
    %1017 = vmatpush.bf16.msra.mxu0 0
    %1018 = vmatpush.bf16.msra.mxu0 0
    %1019 = vmatpush.bf16.msra.mxu0 %v1007
    %1020 = vmatpush.bf16.msra.mxu0 %v1006
    %1021 = vmatmul.bf16.gmra.mxu0 %v1011
    %v1022 = vpop.f32.mrf.mxu0
    %v1023 = vadd.f32 %v996, %v1022
    %v1024 = vpop.f32.mrf.mxu0
    %v1025 = vadd.f32 %v996, %v1024
    %1026 = vdwg.mxu0
    %v1027 = vadd.f32 %v1023, %v43
    %v1028 = vadd.f32 %v1025, %v44
    %v1029 = vld [vmem:[%s6] sm:$0x1]
    %v1030 = vld [vmem:[%s7] sm:$0x1]
    %v1031 = vsel %vm47, %v1027, 0.0
    %1032 = vadd.xlane.f32.xlu0 %v1031
    %v1033 = vpop.xlane.xlu0 %1032
    %v1034 = vsel %vm47, %v1028, 0.0
    %1035 = vadd.xlane.f32.xlu0 %v1034
    %v1036 = vpop.xlane.xlu0 %1035
    %v1037 = vmul.f32 %v1033, %v60
    %v1038 = vmul.f32 %v1036, %v60
    %v1039 = vsub.f32 %v1027, %v1037
    %v1040 = vsub.f32 %v1028, %v1038
    %v1041 = vmul.f32 %v1039, %v1039
    %v1042 = vmul.f32 %v1040, %v1040
    %v1043 = vsel %vm47, %v1041, 0.0
    %1044 = vadd.xlane.f32.xlu0 %v1043
    %v1045 = vpop.xlane.xlu0 %1044
    %v1046 = vsel %vm47, %v1042, 0.0
    %1047 = vadd.xlane.f32.xlu0 %v1046
    %v1048 = vpop.xlane.xlu0 %1047
    %v1049 = vmul.f32 %v1045, %v60
    %v1050 = vmul.f32 %v1048, %v60
    %v1051 = vadd.f32 %v1049, 1e-05
    %v1052 = vadd.f32 %v1050, 1e-05
    %v1053 = vrsqrt.pop %v1051
    %v1054 = vmul.f32 %v1053, %v1051
    %v1055 = vmul.f32 %v1054, %v1053
    %v1056 = vmul.f32 0.5, %v1055
    %v1057 = vsub.f32 1.5, %v1056
    %v1058 = vmul.f32 %v1053, %v1057
    %vm1059 = vweird.f32 %v1051
    %vm1060 = vweird.f32 %v1053
    %vm1061 = vmor %vm1059, %vm1060
    %v1062 = vsel %vm1061, %v1053, %v1058
    %v1063 = vrsqrt.pop %v1052
    %v1064 = vmul.f32 %v1063, %v1052
    %v1065 = vmul.f32 %v1064, %v1063
    %v1066 = vmul.f32 0.5, %v1065
    %v1067 = vsub.f32 1.5, %v1066
    %v1068 = vmul.f32 %v1063, %v1067
    %vm1069 = vweird.f32 %v1052
    %vm1070 = vweird.f32 %v1063
    %vm1071 = vmor %vm1069, %vm1070
    %v1072 = vsel %vm1071, %v1063, %v1068
    %v1073 = vmul.f32 %v1039, %v1062
    %v1074 = vmul.f32 %v1040, %v1072
    %v1076 = vperm.slane %v1029, 0
    %v1078 = vmul.f32 %v1073, %v1076
    %v1079 = vmul.f32 %v1074, %v1076
    %v1081 = vperm.slane %v1030, 0
    %v1083 = vadd.f32 %v1078, %v1081
    %v1084 = vadd.f32 %v1079, %v1081
    %v1085 = vpack.c.bf16 %v1084, %v1083
    %v1086 = vld [vmem:[%s8] sm:$0xf]
    %v1087 = vld [vmem:[%s8 + $0x4] sm:$0xf]
    %v1088 = vld [vmem:[%s8 + $0x8] sm:$0xf]
    %v1089 = vld [vmem:[%s8 + $0xc] sm:$0xf]
    %v1090 = vld [vmem:[%s9] sm:$0x1]
    %v1092 = vperm.slane %v1090, 0
    %v1098 = vunpack.c.l.b16 %v1086
    %v1099 = vunpack.c.l.b16 %v1087
    %v1100 = vunpack.c.l.b16 %v1088
    %v1101 = vunpack.c.l.b16 %v1089
    %v1102 = vpack.c.b16 %v1099, %v1098
    %v1103 = vpack.c.b16 %v1101, %v1100
    %v1107 = vsel %vm47, %v1085, 0
    %1109 = vmatpush.bf16.msra.mxu0 0
    %1110 = vmatpush.bf16.msra.mxu0 0
    %1111 = vmatpush.bf16.msra.mxu0 0
    %1112 = vmatpush.bf16.msra.mxu0 0
    %1113 = vmatpush.bf16.msra.mxu0 0
    %1114 = vmatpush.bf16.msra.mxu0 0
    %1115 = vmatpush.bf16.msra.mxu0 %v1103
    %1116 = vmatpush.bf16.msra.mxu0 %v1102
    %1117 = vmatmul.bf16.gmra.mxu0 %v1107
    %v1118 = vpop.f32.mrf.mxu0
    %v1119 = vadd.f32 %v1092, %v1118
    %v1120 = vpop.f32.mrf.mxu0
    %v1121 = vadd.f32 %v1092, %v1120
    %1122 = vdwg.mxu0
    %v1123 = vmul.f32 %v1119, 0.5
    %v1124 = vmul.f32 %v1121, 0.5
    %v1125 = vmul.f32 %v1119, 0.70710677
    %v1126 = vmul.f32 %v1121, 0.70710677
    %v1127 = vmul.f32 %v1125, %v1125
    %v1128 = vmin.f32 16.0, %v1127
    %v1129 = vmul.f32 %v1128, 2.1237322e-06
    %v1130 = vadd.f32 %v1129, 0.00028619796
    %v1131 = vmul.f32 %v1128, %v1130
    %v1132 = vadd.f32 %v1131, 0.0036580483
    %v1133 = vmul.f32 %v1128, %v1132
    %v1134 = vadd.f32 %v1133, 0.05243302
    %v1135 = vmul.f32 %v1128, %v1134
    %v1136 = vadd.f32 %v1135, 0.18741608
    %v1137 = vmul.f32 %v1128, %v1136
    %v1138 = vadd.f32 %v1137, 1.1283791
    %v1139 = vmul.f32 %v1125, %v1138
    %v1140 = vmul.f32 %v1128, 3.8918573e-05
    %v1141 = vadd.f32 %v1140, 0.001143296
    %v1142 = vmul.f32 %v1128, %v1141
    %v1143 = vadd.f32 %v1142, 0.014752088
    %v1144 = vmul.f32 %v1128, %v1143
    %v1145 = vadd.f32 %v1144, 0.112945676
    %v1146 = vmul.f32 %v1128, %v1145
    %v1147 = vadd.f32 %v1146, 0.4994258
    %v1148 = vmul.f32 %v1128, %v1147
    %v1149 = vadd.f32 %v1148, 1.0
    %v1150 = vrcp.pop %v1149
    %v1151 = vmul.f32 %v1149, %v1150
    %v1152 = vsub.f32 1.0, %v1151
    %v1153 = vmul.f32 %v1150, %v1152
    %v1154 = vadd.f32 %v1150, %v1153
    %vm1155 = vweird.f32 %v1149
    %vm1156 = vweird.f32 %v1150
    %vm1157 = vmor %vm1155, %vm1156
    %v1158 = vsel %vm1157, %v1150, %v1154
    %v1159 = vand.u32 2147483647, %v1149
    %vm1160 = vcmp.eq.f32.partialorder %v1159, 8.507059e+37
    %v1161 = vand.u32 %v1149, 2147483648
    %v1162 = vor.u32 1.1754944e-38, %v1161
    %v1163 = vsel %vm1160, %v1162, %v1158
    %v1164 = vmul.f32 %v1139, %v1163
    %v1165 = vmin.f32 %v1164, 1.0
    %v1166 = vmax.f32 %v1165, -1.0
    %v1167 = vmul.f32 %v1126, %v1126
    %v1168 = vmin.f32 16.0, %v1167
    %v1169 = vmul.f32 %v1168, 2.1237322e-06
    %v1170 = vadd.f32 %v1169, 0.00028619796
    %v1171 = vmul.f32 %v1168, %v1170
    %v1172 = vadd.f32 %v1171, 0.0036580483
    %v1173 = vmul.f32 %v1168, %v1172
    %v1174 = vadd.f32 %v1173, 0.05243302
    %v1175 = vmul.f32 %v1168, %v1174
    %v1176 = vadd.f32 %v1175, 0.18741608
    %v1177 = vmul.f32 %v1168, %v1176
    %v1178 = vadd.f32 %v1177, 1.1283791
    %v1179 = vmul.f32 %v1126, %v1178
    %v1180 = vmul.f32 %v1168, 3.8918573e-05
    %v1181 = vadd.f32 %v1180, 0.001143296
    %v1182 = vmul.f32 %v1168, %v1181
    %v1183 = vadd.f32 %v1182, 0.014752088
    %v1184 = vmul.f32 %v1168, %v1183
    %v1185 = vadd.f32 %v1184, 0.112945676
    %v1186 = vmul.f32 %v1168, %v1185
    %v1187 = vadd.f32 %v1186, 0.4994258
    %v1188 = vmul.f32 %v1168, %v1187
    %v1189 = vadd.f32 %v1188, 1.0
    %v1190 = vrcp.pop %v1189
    %v1191 = vmul.f32 %v1189, %v1190
    %v1192 = vsub.f32 1.0, %v1191
    %v1193 = vmul.f32 %v1190, %v1192
    %v1194 = vadd.f32 %v1190, %v1193
    %vm1195 = vweird.f32 %v1189
    %vm1196 = vweird.f32 %v1190
    %vm1197 = vmor %vm1195, %vm1196
    %v1198 = vsel %vm1197, %v1190, %v1194
    %v1199 = vand.u32 2147483647, %v1189
    %vm1200 = vcmp.eq.f32.partialorder %v1199, 8.507059e+37
    %v1201 = vand.u32 %v1189, 2147483648
    %v1202 = vor.u32 1.1754944e-38, %v1201
    %v1203 = vsel %vm1200, %v1202, %v1198
    %v1204 = vmul.f32 %v1179, %v1203
    %v1205 = vmin.f32 %v1204, 1.0
    %v1206 = vmax.f32 %v1205, -1.0
    %v1207 = vadd.f32 %v1166, 1.0
    %v1208 = vadd.f32 %v1206, 1.0
    %v1209 = vmul.f32 %v1123, %v1207
    %v1210 = vmul.f32 %v1124, %v1208
    %v1211 = vpack.c.bf16 %v1210, %v1209
    %v1212 = vld [vmem:[%s10] sm:$0xf]
    %v1213 = vld [vmem:[%s10 + $0x4] sm:$0xf]
    %v1214 = vld [vmem:[%s10 + $0x8] sm:$0xf]
    %v1215 = vld [vmem:[%s10 + $0xc] sm:$0xf]
    %v1216 = vld [vmem:[%s10 + $0x10] sm:$0xf]
    %v1217 = vld [vmem:[%s10 + $0x14] sm:$0xf]
    %v1218 = vld [vmem:[%s10 + $0x18] sm:$0xf]
    %v1219 = vld [vmem:[%s10 + $0x1c] sm:$0xf]
    %v1220 = vld [vmem:[%s10 + $0x20] sm:$0xf]
    %v1221 = vld [vmem:[%s10 + $0x24] sm:$0xf]
    %v1222 = vld [vmem:[%s10 + $0x28] sm:$0xf]
    %v1223 = vld [vmem:[%s10 + $0x2c] sm:$0xf]
    %v1224 = vld [vmem:[%s10 + $0x30] sm:$0xf]
    %v1225 = vld [vmem:[%s10 + $0x34] sm:$0xf]
    %v1226 = vld [vmem:[%s10 + $0x38] sm:$0xf]
    %v1227 = vld [vmem:[%s10 + $0x3c] sm:$0xf]
    %v1228 = vld [vmem:[%s11] sm:$0x1]
    %v1230 = vperm.slane %v1228, 0
    %v1248 = vunpack.c.l.b16 %v1212
    %v1249 = vunpack.c.l.b16 %v1213
    %v1250 = vunpack.c.l.b16 %v1214
    %v1251 = vunpack.c.l.b16 %v1215
    %v1252 = vunpack.c.l.b16 %v1216
    %v1253 = vunpack.c.l.b16 %v1217
    %v1254 = vunpack.c.l.b16 %v1218
    %v1255 = vunpack.c.l.b16 %v1219
    %v1256 = vunpack.c.l.b16 %v1220
    %v1257 = vunpack.c.l.b16 %v1221
    %v1258 = vunpack.c.l.b16 %v1222
    %v1259 = vunpack.c.l.b16 %v1223
    %v1260 = vunpack.c.l.b16 %v1224
    %v1261 = vunpack.c.l.b16 %v1225
    %v1262 = vunpack.c.l.b16 %v1226
    %v1263 = vunpack.c.l.b16 %v1227
    %v1264 = vpack.c.b16 %v1249, %v1248
    %v1265 = vpack.c.b16 %v1251, %v1250
    %v1266 = vpack.c.b16 %v1253, %v1252
    %v1267 = vpack.c.b16 %v1255, %v1254
    %v1268 = vpack.c.b16 %v1257, %v1256
    %v1269 = vpack.c.b16 %v1259, %v1258
    %v1270 = vpack.c.b16 %v1261, %v1260
    %v1271 = vpack.c.b16 %v1263, %v1262
    %1280 = vmatpush.bf16.msra.mxu0 %v1271
    %1281 = vmatpush.bf16.msra.mxu0 %v1270
    %1282 = vmatpush.bf16.msra.mxu0 %v1269
    %1283 = vmatpush.bf16.msra.mxu0 %v1268
    %1284 = vmatpush.bf16.msra.mxu0 %v1267
    %1285 = vmatpush.bf16.msra.mxu0 %v1266
    %1286 = vmatpush.bf16.msra.mxu0 %v1265
    %1287 = vmatpush.bf16.msra.mxu0 %v1264
    %1288 = vmatmul.bf16.gmra.mxu0 %v1211
    %v1289 = vpop.f32.mrf.mxu0
    %v1290 = vadd.f32 %v1230, %v1289
    %v1291 = vpop.f32.mrf.mxu0
    %v1292 = vadd.f32 %v1230, %v1291
    %1293 = vdwg.mxu0
    %v1294 = vadd.f32 %v1290, %v1027
    %v1295 = vadd.f32 %v1292, %v1028
    %1296 = vst.msk [vmem:[#allocation2] sm:$0xff] %vm47, %v1294
    %1297 = vst.msk [vmem:[#allocation2 + $0x8] sm:$0xff] %vm47, %v1295
    // Predicated region
    $region50: #{tpu_custom_call.1} parent=1 // pred_check
      _
    $region51: #{tpu_custom_call.1} parent=1 // pred_check_branch
      %1299 = sbr.rel (0) target = $region53
    $region52: #{tpu_custom_call.1} parent=1 // pred_region
      %1301 = vsyncadd [#allocation3], 0
      %s1302 = sshll.u32 [#allocation2], 4
      %s1303 = int_to_ptr.vmem [resolvable:$true] %s1302
      %s1304 = sshll.u32 %s12, 4
      %s1305 = int_to_ptr.hbm [resolvable:$true] %s1304
      %1310 = dma.vmem_to_hbm [thread:$0]  %s1303, 256, %s1305, [#allocation3], 128, 128, 8
    $region53: #{tpu_custom_call.1} parent=1 // pred_fallthru
      _
    // Predicated region
    $region54: #{tpu_custom_call.1} parent=1 // pred_check
      _
    $region55: #{tpu_custom_call.1} parent=1 // pred_check_branch
      %1312 = sbr.rel (0) target = $region57
    $region56: #{tpu_custom_call.1} parent=1 // pred_region
      %1314 = dma.done [#allocation3], 256
    $region57: #{tpu_custom_call.1} parent=1 // pred_fallthru
      _
    %1315 = vsyncpa [#allocation3], 1

</llo_original>
